<compile_context>
chip_gen: v7x
topology: tpu7x:2x2x1
jax: 0.10.0
libtpu: 0.0.40
codegen_flags: <defaults>
</compile_context>

<pallas_src>
import functools
import math

import numpy as np
import jax
import jax.numpy as jnp
from jax import lax
from jax.experimental import pallas as pl
from jax.experimental.pallas import tpu as pltpu


def _fused_cross_attn_kernel(x_ref, xe_ref, xet_ref, a_ref, wv_ref, wout_ref,
                             bias_ref, mask_ref, o_ref, stacked_ref, *,
                             HeWe, HW, Hd, offsets):
    # x_ref:    (1, C, 2*HW)    f32   (pair of batches packed along lanes)
    # xe_ref:   (1, C, 2*HeWe)  bf16
    # xet_ref:  (1, 2*HeWe, C)  bf16
    # a_ref:    (C, C)          bf16  (= scale * Wk^T Wq, folded at trace time)
    # wv_ref:   (Hd, C)         bf16
    # wout_ref: (C, 9*Hd)       bf16  (3x3 conv weights concatenated over taps)
    # bias_ref: (C, 1)          f32
    # mask_ref: (9, 1, 2*HW)    f32   (0/1 conv boundary masks per tap)
    # o_ref:    (1, C, 2*HW)
    # stacked_ref: (9*Hd, 2*HW) f32 VMEM scratch
    f32, bf16 = jnp.float32, jnp.bfloat16
    lane_n = 2 * HW

    xf = x_ref[0]                                  # (C, 2HW) f32 (residual)
    x_bf = xf.astype(bf16)
    xe_bf = xe_ref[0]                              # (C, 2HeWe) bf16
    xet_bf = xet_ref[0]                            # (2HeWe, C) bf16

    # logits^T[y, p] = scale * xe[:, y]^T (Wk^T Wq) x[:, p]; both matmuls
    # contract over C in natural orientation, pair stacked to a 128x128 push.
    u = jnp.dot(xet_bf, a_ref[...], preferred_element_type=f32)            # (2HeWe, C)
    logits_t = jnp.dot(u.astype(bf16), x_bf, preferred_element_type=f32)   # (2HeWe, 2HW)

    # Mask the cross-batch blocks of the pair before the softmax.
    ri = lax.broadcasted_iota(jnp.int32, logits_t.shape, 0)
    ci = lax.broadcasted_iota(jnp.int32, logits_t.shape, 1)
    same_batch = (ri < HeWe) == (ci < HW)
    logits_t = jnp.where(same_batch, logits_t, -1e30)

    # Softmax over the key axis (axis 0), normalization deferred.  f32 math.
    m = jnp.max(logits_t, axis=0, keepdims=True)                           # (1, 2HW)
    e = jnp.exp(logits_t - m)                                              # (2HeWe, 2HW)
    ssum = jnp.sum(e, axis=0, keepdims=True)                               # (1, 2HW)

    v = jnp.dot(wv_ref[...], xe_bf, preferred_element_type=f32)            # (Hd, 2HeWe)
    out_u = jnp.dot(v.astype(bf16), e.astype(bf16),
                    preferred_element_type=f32)                            # (Hd, 2HW)
    attn = out_u * pl.reciprocal(ssum, approx=True)                        # (Hd, 2HW) f32

    # 3x3 conv (padding=1): 8 XLU lane rolls + 0/1 boundary masks, then one
    # stacked K=9*Hd matmul against the concatenated conv weights.
    for k, off in enumerate(offsets):
        if off == 0:
            shifted = attn
        else:
            shifted = pltpu.roll(attn, shift=(-off) % lane_n, axis=1)
        stacked_ref[k * Hd:(k + 1) * Hd, :] = shifted * mask_ref[k]
    conv = jnp.dot(wout_ref[...], stacked_ref[...].astype(bf16),
                   preferred_element_type=f32)                             # (C, 2HW)

    o_ref[0] = (conv + bias_ref[...] + xf).astype(o_ref.dtype)


def _build_tap_masks(H, W, repeat=2):
    """mask[k, 0, j*HW + p] = 1 iff 3x3 tap k of output pixel p is in-bounds."""
    HW = H * W
    m = np.zeros((9, 1, repeat * HW), np.float32)
    for kh in range(3):
        for kw in range(3):
            k = kh * 3 + kw
            dh, dw = kh - 1, kw - 1
            for h in range(H):
                for w in range(W):
                    if 0 <= h + dh < H and 0 <= w + dw < W:
                        p = h * W + w
                        for r in range(repeat):
                            m[k, 0, r * HW + p] = 1.0
    return m


def cross_attention(x, xe, params, n_div=12, n_head=1):
    # n_head == 1 is the module default; multi-head would add a head loop.
    assert n_head == 1, "only n_head=1 (module default) is implemented"
    B, C, H, W = x.shape
    _, Ce, He, We = xe.shape
    assert Ce == C and C % n_div == 0
    Hd = C // (n_head * n_div)
    HW, HeWe = H * W, He * We
    scale = 1.0 / math.sqrt(C // n_div)

    # --- Weight preprocessing (trace-time, constant-folded by XLA). ---------
    wq = params["wq"].reshape(Hd, C).astype(jnp.float32)
    wkv = params["wkv"].reshape(2 * Hd, C).astype(jnp.float32)
    wk, wv = wkv[:Hd], wkv[Hd:]
    a_mat = (scale * (wk.T @ wq)).astype(jnp.bfloat16)                 # (C, C)
    wv_bf = wv.astype(jnp.bfloat16)                                    # (Hd, C)
    wout = params["wout"].astype(jnp.float32)                          # (C, Hd, 3, 3)
    wout_cat = jnp.transpose(wout, (0, 2, 3, 1)).reshape(C, 9 * Hd)    # tap-major cols
    wout_cat = wout_cat.astype(jnp.bfloat16)
    bout = params["bout"].reshape(C, 1).astype(jnp.float32)
    tap_mask = jnp.asarray(_build_tap_masks(H, W), jnp.float32)        # (9, 1, 2HW)
    offsets = tuple((kh - 1) * W + (kw - 1) for kh in range(3) for kw in range(3))

    # --- Activation layout plumbing: pack batch pairs along the lane axis. --
    Bp2 = B + (B % 2)
    if Bp2 != B:
        pad = [(0, Bp2 - B)] + [(0, 0)] * 3
        x_p, xe_p = jnp.pad(x, pad), jnp.pad(xe, pad)
    else:
        x_p, xe_p = x, xe
    Bp = Bp2 // 2

    def pack_pairs(t, n):  # (Bp2, C, n) -> (Bp, C, 2n); lanes = [batch0 | batch1]
        return jnp.transpose(t.reshape(Bp, 2, C, n), (0, 2, 1, 3)).reshape(Bp, C, 2 * n)

    x_flat = x_p.reshape(Bp2, C, HW).astype(jnp.float32)
    xe_flat = xe_p.reshape(Bp2, C, HeWe).astype(jnp.float32)
    x_pair = pack_pairs(x_flat, HW)                                       # (Bp, C, 2HW) f32
    xe_pair = pack_pairs(xe_flat, HeWe).astype(jnp.bfloat16)              # (Bp, C, 2HeWe)
    xet_pair = jnp.transpose(xe_flat, (0, 2, 1)).reshape(Bp, 2 * HeWe, C)
    xet_pair = xet_pair.astype(jnp.bfloat16)                              # (Bp, 2HeWe, C)

    kernel = functools.partial(_fused_cross_attn_kernel,
                               HeWe=HeWe, HW=HW, Hd=Hd, offsets=offsets)

    out_pair = pl.pallas_call(
        kernel,
        out_shape=jax.ShapeDtypeStruct((Bp, C, 2 * HW), x.dtype),
        grid=(Bp,),
        in_specs=[
            pl.BlockSpec((1, C, 2 * HW), lambda b: (b, 0, 0)),
            pl.BlockSpec((1, C, 2 * HeWe), lambda b: (b, 0, 0)),
            pl.BlockSpec((1, 2 * HeWe, C), lambda b: (b, 0, 0)),
            pl.BlockSpec((C, C), lambda b: (0, 0)),
            pl.BlockSpec((Hd, C), lambda b: (0, 0)),
            pl.BlockSpec((C, 9 * Hd), lambda b: (0, 0)),
            pl.BlockSpec((C, 1), lambda b: (0, 0)),
            pl.BlockSpec((9, 1, 2 * HW), lambda b: (0, 0, 0)),
        ],
        out_specs=pl.BlockSpec((1, C, 2 * HW), lambda b: (b, 0, 0)),
        scratch_shapes=[pltpu.VMEM((9 * Hd, 2 * HW), jnp.float32)],
        compiler_params=pltpu.CompilerParams(dimension_semantics=("parallel",)),
    )(x_pair, xe_pair, xet_pair, a_mat, wv_bf, wout_cat, bout, tap_mask)

    out = jnp.transpose(out_pair.reshape(Bp, C, 2, HW), (0, 2, 1, 3))
    out = out.reshape(Bp2, C, H, W)
    return out[:B]


def reference(x, xe, wq, wkv, wout, bout, n_div=12):
    # Pure-JAX (f32) re-implementation of the PyTorch forward (n_head=1).
    B, C, H, W = x.shape
    Hd = C // n_div
    q = jnp.einsum("oc,bchw->bohw", wq.reshape(Hd, C), x)
    kv = jnp.einsum("oc,bchw->bohw", wkv.reshape(2 * Hd, C), xe)
    k, v = kv[:, :Hd], kv[:, Hd:]
    attn = jnp.einsum("bchw,bcyx->bhwyx", q, k) / math.sqrt(C // n_div)
    attn = attn.reshape(B, H, W, -1)
    attn = jax.nn.softmax(attn, axis=-1)
    attn = attn.reshape(B, H, W, xe.shape[-2], xe.shape[-1])
    out = jnp.einsum("bhwyx,bcyx->bchw", attn, v)
    out = lax.conv_general_dilated(out, wout, (1, 1), ((1, 1), (1, 1)),
                                   dimension_numbers=("NCHW", "OIHW", "NCHW"))
    out = out + bout.reshape(1, C, 1, 1)
    return out + x


if __name__ == "__main__":
    B, C, H, W = 4, 48, 8, 8          # B=4 -> grid=(2,) keeps both v7x TCs busy
    He, We = 8, 8
    n_div, n_head = 12, 1
    Hd = C // n_div

    key = jax.random.PRNGKey(0)
    kx, ke, k1, k2, k3, k4 = jax.random.split(key, 6)
    x = jax.random.normal(kx, (B, C, H, W), jnp.float32)
    xe = jax.random.normal(ke, (B, C, He, We), jnp.float32)

    # Deterministic synthetic parameters (shapes from the module's __init__).
    params = dict(
        wq=jax.random.normal(k1, (Hd, C, 1, 1), jnp.float32) / math.sqrt(C),
        wkv=jax.random.normal(k2, (2 * Hd, C, 1, 1), jnp.float32) / math.sqrt(C),
        wout=jax.random.normal(k3, (C, Hd, 3, 3), jnp.float32) / math.sqrt(Hd * 9),
        bout=jax.random.normal(k4, (C,), jnp.float32) * 0.02,
    )

    out = cross_attention(x, xe, params, n_div=n_div, n_head=n_head)
    out = jax.block_until_ready(out)

    ref = reference(x, xe, params["wq"], params["wkv"], params["wout"],
                    params["bout"], n_div)
    # bf16 MXU operands (f32 accumulation) warrant a slightly looser tolerance
    # than the pure-f32 reference.
    if not jnp.allclose(out, ref, atol=3e-2, rtol=3e-2):
        raise AssertionError(
            f"mismatch vs reference: max abs err={float(jnp.max(jnp.abs(out - ref)))}")

    print("KERNEL_OK")
</pallas_src>

<mosaic_0001>
module attributes {stable_mosaic.version = 11 : i64} {
  func.func @_fused_cross_attn_kernel(%arg0: i32, %arg1: memref<1x48x128xf32, #tpu.memory_space<vmem>>, %arg2: memref<1x48x128xbf16, #tpu.memory_space<vmem>>, %arg3: memref<1x128x48xbf16, #tpu.memory_space<vmem>>, %arg4: memref<48x48xbf16, #tpu.memory_space<vmem>>, %arg5: memref<4x48xbf16, #tpu.memory_space<vmem>>, %arg6: memref<48x36xbf16, #tpu.memory_space<vmem>>, %arg7: memref<48x1xf32, #tpu.memory_space<vmem>>, %arg8: memref<9x1x128xf32, #tpu.memory_space<vmem>>, %arg9: memref<1x48x128xf32, #tpu.memory_space<vmem>>, %arg10: memref<36x128xf32, #tpu.memory_space<vmem>>) attributes {dimension_semantics = [#tpu.dimension_semantics<parallel>], iteration_bounds = array<i64: 2>, scalar_prefetch = 0 : i64, scratch_operands = 1 : i64, tpu.core_type = #tpu.core_type<tc>, window_params = [{transform_indices = @transform_0, window_bounds = array<i64: 1, 48, 128>}, {transform_indices = @transform_1, window_bounds = array<i64: 1, 48, 128>}, {transform_indices = @transform_2, window_bounds = array<i64: 1, 128, 48>}, {pipeline_mode = #tpu.pipeline_mode<synchronous>, transform_indices = @transform_3, window_bounds = array<i64: 48, 48>}, {pipeline_mode = #tpu.pipeline_mode<synchronous>, transform_indices = @transform_4, window_bounds = array<i64: 4, 48>}, {pipeline_mode = #tpu.pipeline_mode<synchronous>, transform_indices = @transform_5, window_bounds = array<i64: 48, 36>}, {pipeline_mode = #tpu.pipeline_mode<synchronous>, transform_indices = @transform_6, window_bounds = array<i64: 48, 1>}, {pipeline_mode = #tpu.pipeline_mode<synchronous>, transform_indices = @transform_7, window_bounds = array<i64: 9, 1, 128>}, {transform_indices = @transform_8, window_bounds = array<i64: 1, 48, 128>}]} {
    %c0 = arith.constant 0 : index
    %c0_0 = arith.constant 0 : index
    %c0_1 = arith.constant 0 : index
    %0 = vector.load %arg1[%c0, %c0_0, %c0_1] : memref<1x48x128xf32, #tpu.memory_space<vmem>>, vector<1x48x128xf32>
    %1 = vector.shape_cast %0 : vector<1x48x128xf32> to vector<48x128xf32>
    %2 = arith.truncf %1 : vector<48x128xf32> to vector<48x128xbf16>
    %c0_2 = arith.constant 0 : index
    %c0_3 = arith.constant 0 : index
    %c0_4 = arith.constant 0 : index
    %3 = vector.load %arg2[%c0_2, %c0_3, %c0_4] : memref<1x48x128xbf16, #tpu.memory_space<vmem>>, vector<1x48x128xbf16>
    %4 = vector.shape_cast %3 : vector<1x48x128xbf16> to vector<48x128xbf16>
    %c0_5 = arith.constant 0 : index
    %c0_6 = arith.constant 0 : index
    %c0_7 = arith.constant 0 : index
    %5 = vector.load %arg3[%c0_5, %c0_6, %c0_7] : memref<1x128x48xbf16, #tpu.memory_space<vmem>>, vector<1x128x48xbf16>
    %6 = vector.shape_cast %5 : vector<1x128x48xbf16> to vector<128x48xbf16>
    %c0_8 = arith.constant 0 : index
    %c0_9 = arith.constant 0 : index
    %7 = vector.load %arg4[%c0_8, %c0_9] : memref<48x48xbf16, #tpu.memory_space<vmem>>, vector<48x48xbf16>
    %cst = arith.constant dense<0.000000e+00> : vector<128x48xf32>
    %8 = tpu.matmul %6, %7, %cst {dimension_numbers = #tpu.dot_dimension_numbers<[1], [0], [0], [1], [0, 0, 1, 1], [], []>} : vector<128x48xbf16>, vector<48x48xbf16>, vector<128x48xf32> -> vector<128x48xf32>
    %9 = arith.truncf %8 : vector<128x48xf32> to vector<128x48xbf16>
    %cst_10 = arith.constant dense<0.000000e+00> : vector<128x128xf32>
    %10 = tpu.matmul %9, %2, %cst_10 {dimension_numbers = #tpu.dot_dimension_numbers<[1], [0], [0], [1], [0, 0, 1, 1], [], []>} : vector<128x48xbf16>, vector<48x128xbf16>, vector<128x128xf32> -> vector<128x128xf32>
    %11 = tpu.iota {dimensions = array<i32: 0>} : vector<128x128xi32>
    %12 = tpu.iota {dimensions = array<i32: 1>} : vector<128x128xi32>
    %c64_i32 = arith.constant 64 : i32
    %13 = vector.broadcast %c64_i32 : i32 to vector<128x128xi32>
    %14 = arith.cmpi slt, %11, %13 : vector<128x128xi32>
    %c64_i32_11 = arith.constant 64 : i32
    %15 = vector.broadcast %c64_i32_11 : i32 to vector<128x128xi32>
    %16 = arith.cmpi slt, %12, %15 : vector<128x128xi32>
    %17 = arith.xori %14, %16 : vector<128x128xi1>
    %cst_12 = arith.constant dense<true> : vector<128x128xi1>
    %18 = arith.xori %17, %cst_12 : vector<128x128xi1>
    %cst_13 = arith.constant -1.000000e+30 : f32
    %19 = vector.broadcast %cst_13 : f32 to vector<128x128xf32>
    %20 = arith.select %18, %10, %19 : vector<128x128xi1>, vector<128x128xf32>
    %cst_14 = arith.constant dense<0xFF800000> : vector<128xf32>
    %21 = vector.multi_reduction <maximumf>, %20, %cst_14 [0] : vector<128x128xf32> to vector<128xf32>
    %22 = vector.shape_cast %21 : vector<128xf32> to vector<1x128xf32>
    %23 = vector.broadcast %22 : vector<1x128xf32> to vector<128x128xf32>
    %24 = arith.subf %20, %23 : vector<128x128xf32>
    %25 = math.exp %24 : vector<128x128xf32>
    %cst_15 = arith.constant dense<0.000000e+00> : vector<128xf32>
    %26 = vector.multi_reduction <add>, %25, %cst_15 [0] : vector<128x128xf32> to vector<128xf32>
    %27 = vector.shape_cast %26 : vector<128xf32> to vector<1x128xf32>
    %c0_16 = arith.constant 0 : index
    %c0_17 = arith.constant 0 : index
    %28 = vector.load %arg5[%c0_16, %c0_17] : memref<4x48xbf16, #tpu.memory_space<vmem>>, vector<4x48xbf16>
    %cst_18 = arith.constant dense<0.000000e+00> : vector<4x128xf32>
    %29 = tpu.matmul %28, %4, %cst_18 {dimension_numbers = #tpu.dot_dimension_numbers<[1], [0], [0], [1], [0, 0, 1, 1], [], []>} : vector<4x48xbf16>, vector<48x128xbf16>, vector<4x128xf32> -> vector<4x128xf32>
    %30 = arith.truncf %29 : vector<4x128xf32> to vector<4x128xbf16>
    %31 = arith.truncf %25 : vector<128x128xf32> to vector<128x128xbf16>
    %cst_19 = arith.constant dense<0.000000e+00> : vector<4x128xf32>
    %32 = tpu.matmul %30, %31, %cst_19 {dimension_numbers = #tpu.dot_dimension_numbers<[1], [0], [0], [1], [0, 0, 1, 1], [], []>} : vector<4x128xbf16>, vector<128x128xbf16>, vector<4x128xf32> -> vector<4x128xf32>
    %33 = tpu.reciprocal %27 {approx = true} : vector<1x128xf32> -> vector<1x128xf32>
    %34 = vector.broadcast %33 : vector<1x128xf32> to vector<4x128xf32>
    %35 = arith.mulf %32, %34 : vector<4x128xf32>
    %c9_i32 = arith.constant 9 : i32
    %36 = tpu.dynamic_rotate %35 by %c9_i32 dim 1 : vector<4x128xf32>, i32 -> vector<4x128xf32>
    %c0_20 = arith.constant 0 : index
    %c0_21 = arith.constant 0 : index
    %c0_22 = arith.constant 0 : index
    %37 = vector.load %arg8[%c0_20, %c0_21, %c0_22] : memref<9x1x128xf32, #tpu.memory_space<vmem>>, vector<1x1x128xf32>
    %38 = vector.shape_cast %37 : vector<1x1x128xf32> to vector<1x128xf32>
    %39 = vector.broadcast %38 : vector<1x128xf32> to vector<4x128xf32>
    %40 = arith.mulf %36, %39 : vector<4x128xf32>
    %c0_23 = arith.constant 0 : index
    %c0_24 = arith.constant 0 : index
    %41 = vector.load %arg10[%c0_23, %c0_24] : memref<36x128xf32, #tpu.memory_space<vmem>>, vector<4x128xf32>
    tpu.vector_store %arg10[%c0_23, %c0_24], %40 {strides = array<i32>} : memref<36x128xf32, #tpu.memory_space<vmem>>, vector<4x128xf32>,
    %c8_i32 = arith.constant 8 : i32
    %42 = tpu.dynamic_rotate %35 by %c8_i32 dim 1 : vector<4x128xf32>, i32 -> vector<4x128xf32>
    %c1 = arith.constant 1 : index
    %c0_25 = arith.constant 0 : index
    %c0_26 = arith.constant 0 : index
    %43 = vector.load %arg8[%c1, %c0_25, %c0_26] : memref<9x1x128xf32, #tpu.memory_space<vmem>>, vector<1x1x128xf32>
    %44 = vector.shape_cast %43 : vector<1x1x128xf32> to vector<1x128xf32>
    %45 = vector.broadcast %44 : vector<1x128xf32> to vector<4x128xf32>
    %46 = arith.mulf %42, %45 : vector<4x128xf32>
    %c4 = arith.constant 4 : index
    %c0_27 = arith.constant 0 : index
    %47 = vector.load %arg10[%c4, %c0_27] : memref<36x128xf32, #tpu.memory_space<vmem>>, vector<4x128xf32>
    tpu.vector_store %arg10[%c4, %c0_27], %46 {strides = array<i32>} : memref<36x128xf32, #tpu.memory_space<vmem>>, vector<4x128xf32>,
    %c7_i32 = arith.constant 7 : i32
    %48 = tpu.dynamic_rotate %35 by %c7_i32 dim 1 : vector<4x128xf32>, i32 -> vector<4x128xf32>
    %c2 = arith.constant 2 : index
    %c0_28 = arith.constant 0 : index
    %c0_29 = arith.constant 0 : index
    %49 = vector.load %arg8[%c2, %c0_28, %c0_29] : memref<9x1x128xf32, #tpu.memory_space<vmem>>, vector<1x1x128xf32>
    %50 = vector.shape_cast %49 : vector<1x1x128xf32> to vector<1x128xf32>
    %51 = vector.broadcast %50 : vector<1x128xf32> to vector<4x128xf32>
    %52 = arith.mulf %48, %51 : vector<4x128xf32>
    %c8 = arith.constant 8 : index
    %c0_30 = arith.constant 0 : index
    %53 = vector.load %arg10[%c8, %c0_30] : memref<36x128xf32, #tpu.memory_space<vmem>>, vector<4x128xf32>
    tpu.vector_store %arg10[%c8, %c0_30], %52 {strides = array<i32>} : memref<36x128xf32, #tpu.memory_space<vmem>>, vector<4x128xf32>,
    %c1_i32 = arith.constant 1 : i32
    %54 = tpu.dynamic_rotate %35 by %c1_i32 dim 1 : vector<4x128xf32>, i32 -> vector<4x128xf32>
    %c3 = arith.constant 3 : index
    %c0_31 = arith.constant 0 : index
    %c0_32 = arith.constant 0 : index
    %55 = vector.load %arg8[%c3, %c0_31, %c0_32] : memref<9x1x128xf32, #tpu.memory_space<vmem>>, vector<1x1x128xf32>
    %56 = vector.shape_cast %55 : vector<1x1x128xf32> to vector<1x128xf32>
    %57 = vector.broadcast %56 : vector<1x128xf32> to vector<4x128xf32>
    %58 = arith.mulf %54, %57 : vector<4x128xf32>
    %c12 = arith.constant 12 : index
    %c0_33 = arith.constant 0 : index
    %59 = vector.load %arg10[%c12, %c0_33] : memref<36x128xf32, #tpu.memory_space<vmem>>, vector<4x128xf32>
    tpu.vector_store %arg10[%c12, %c0_33], %58 {strides = array<i32>} : memref<36x128xf32, #tpu.memory_space<vmem>>, vector<4x128xf32>,
    %c4_34 = arith.constant 4 : index
    %c0_35 = arith.constant 0 : index
    %c0_36 = arith.constant 0 : index
    %60 = vector.load %arg8[%c4_34, %c0_35, %c0_36] : memref<9x1x128xf32, #tpu.memory_space<vmem>>, vector<1x1x128xf32>
    %61 = vector.shape_cast %60 : vector<1x1x128xf32> to vector<1x128xf32>
    %62 = vector.broadcast %61 : vector<1x128xf32> to vector<4x128xf32>
    %63 = arith.mulf %35, %62 : vector<4x128xf32>
    %c16 = arith.constant 16 : index
    %c0_37 = arith.constant 0 : index
    %64 = vector.load %arg10[%c16, %c0_37] : memref<36x128xf32, #tpu.memory_space<vmem>>, vector<4x128xf32>
    tpu.vector_store %arg10[%c16, %c0_37], %63 {strides = array<i32>} : memref<36x128xf32, #tpu.memory_space<vmem>>, vector<4x128xf32>,
    %c127_i32 = arith.constant 127 : i32
    %65 = tpu.dynamic_rotate %35 by %c127_i32 dim 1 : vector<4x128xf32>, i32 -> vector<4x128xf32>
    %c5 = arith.constant 5 : index
    %c0_38 = arith.constant 0 : index
    %c0_39 = arith.constant 0 : index
    %66 = vector.load %arg8[%c5, %c0_38, %c0_39] : memref<9x1x128xf32, #tpu.memory_space<vmem>>, vector<1x1x128xf32>
    %67 = vector.shape_cast %66 : vector<1x1x128xf32> to vector<1x128xf32>
    %68 = vector.broadcast %67 : vector<1x128xf32> to vector<4x128xf32>
    %69 = arith.mulf %65, %68 : vector<4x128xf32>
    %c20 = arith.constant 20 : index
    %c0_40 = arith.constant 0 : index
    %70 = vector.load %arg10[%c20, %c0_40] : memref<36x128xf32, #tpu.memory_space<vmem>>, vector<4x128xf32>
    tpu.vector_store %arg10[%c20, %c0_40], %69 {strides = array<i32>} : memref<36x128xf32, #tpu.memory_space<vmem>>, vector<4x128xf32>,
    %c121_i32 = arith.constant 121 : i32
    %71 = tpu.dynamic_rotate %35 by %c121_i32 dim 1 : vector<4x128xf32>, i32 -> vector<4x128xf32>
    %c6 = arith.constant 6 : index
    %c0_41 = arith.constant 0 : index
    %c0_42 = arith.constant 0 : index
    %72 = vector.load %arg8[%c6, %c0_41, %c0_42] : memref<9x1x128xf32, #tpu.memory_space<vmem>>, vector<1x1x128xf32>
    %73 = vector.shape_cast %72 : vector<1x1x128xf32> to vector<1x128xf32>
    %74 = vector.broadcast %73 : vector<1x128xf32> to vector<4x128xf32>
    %75 = arith.mulf %71, %74 : vector<4x128xf32>
    %c24 = arith.constant 24 : index
    %c0_43 = arith.constant 0 : index
    %76 = vector.load %arg10[%c24, %c0_43] : memref<36x128xf32, #tpu.memory_space<vmem>>, vector<4x128xf32>
    tpu.vector_store %arg10[%c24, %c0_43], %75 {strides = array<i32>} : memref<36x128xf32, #tpu.memory_space<vmem>>, vector<4x128xf32>,
    %c120_i32 = arith.constant 120 : i32
    %77 = tpu.dynamic_rotate %35 by %c120_i32 dim 1 : vector<4x128xf32>, i32 -> vector<4x128xf32>
    %c7 = arith.constant 7 : index
    %c0_44 = arith.constant 0 : index
    %c0_45 = arith.constant 0 : index
    %78 = vector.load %arg8[%c7, %c0_44, %c0_45] : memref<9x1x128xf32, #tpu.memory_space<vmem>>, vector<1x1x128xf32>
    %79 = vector.shape_cast %78 : vector<1x1x128xf32> to vector<1x128xf32>
    %80 = vector.broadcast %79 : vector<1x128xf32> to vector<4x128xf32>
    %81 = arith.mulf %77, %80 : vector<4x128xf32>
    %c28 = arith.constant 28 : index
    %c0_46 = arith.constant 0 : index
    %82 = vector.load %arg10[%c28, %c0_46] : memref<36x128xf32, #tpu.memory_space<vmem>>, vector<4x128xf32>
    tpu.vector_store %arg10[%c28, %c0_46], %81 {strides = array<i32>} : memref<36x128xf32, #tpu.memory_space<vmem>>, vector<4x128xf32>,
    %c119_i32 = arith.constant 119 : i32
    %83 = tpu.dynamic_rotate %35 by %c119_i32 dim 1 : vector<4x128xf32>, i32 -> vector<4x128xf32>
    %c8_47 = arith.constant 8 : index
    %c0_48 = arith.constant 0 : index
    %c0_49 = arith.constant 0 : index
    %84 = vector.load %arg8[%c8_47, %c0_48, %c0_49] : memref<9x1x128xf32, #tpu.memory_space<vmem>>, vector<1x1x128xf32>
    %85 = vector.shape_cast %84 : vector<1x1x128xf32> to vector<1x128xf32>
    %86 = vector.broadcast %85 : vector<1x128xf32> to vector<4x128xf32>
    %87 = arith.mulf %83, %86 : vector<4x128xf32>
    %c32 = arith.constant 32 : index
    %c0_50 = arith.constant 0 : index
    %88 = vector.load %arg10[%c32, %c0_50] : memref<36x128xf32, #tpu.memory_space<vmem>>, vector<4x128xf32>
    tpu.vector_store %arg10[%c32, %c0_50], %87 {strides = array<i32>} : memref<36x128xf32, #tpu.memory_space<vmem>>, vector<4x128xf32>,
    %c0_51 = arith.constant 0 : index
    %c0_52 = arith.constant 0 : index
    %89 = vector.load %arg6[%c0_51, %c0_52] : memref<48x36xbf16, #tpu.memory_space<vmem>>, vector<48x36xbf16>
    %c0_53 = arith.constant 0 : index
    %c0_54 = arith.constant 0 : index
    %90 = vector.load %arg10[%c0_53, %c0_54] : memref<36x128xf32, #tpu.memory_space<vmem>>, vector<36x128xf32>
    %91 = arith.truncf %90 : vector<36x128xf32> to vector<36x128xbf16>
    %cst_55 = arith.constant dense<0.000000e+00> : vector<48x128xf32>
    %92 = tpu.matmul %89, %91, %cst_55 {dimension_numbers = #tpu.dot_dimension_numbers<[1], [0], [0], [1], [0, 0, 1, 1], [], []>} : vector<48x36xbf16>, vector<36x128xbf16>, vector<48x128xf32> -> vector<48x128xf32>
    %c0_56 = arith.constant 0 : index
    %c0_57 = arith.constant 0 : index
    %93 = vector.load %arg7[%c0_56, %c0_57] : memref<48x1xf32, #tpu.memory_space<vmem>>, vector<48x1xf32>
    %94 = vector.broadcast %93 : vector<48x1xf32> to vector<48x128xf32>
    %95 = arith.addf %92, %94 : vector<48x128xf32>
    %96 = arith.addf %95, %1 : vector<48x128xf32>
    %c0_58 = arith.constant 0 : index
    %c0_59 = arith.constant 0 : index
    %c0_60 = arith.constant 0 : index
    %97 = vector.load %arg9[%c0_58, %c0_59, %c0_60] : memref<1x48x128xf32, #tpu.memory_space<vmem>>, vector<1x48x128xf32>
    %98 = vector.shape_cast %97 : vector<1x48x128xf32> to vector<48x128xf32>
    %99 = vector.shape_cast %96 : vector<48x128xf32> to vector<1x48x128xf32>
    tpu.vector_store %arg9[%c0_58, %c0_59, %c0_60], %99 {strides = array<i32>} : memref<1x48x128xf32, #tpu.memory_space<vmem>>, vector<1x48x128xf32>,
    return
  }
  func.func @transform_0(%arg0: i32) -> (i32, i32, i32) {
    %c0_i32 = arith.constant 0 : i32
    %c0_i32_0 = arith.constant 0 : i32
    %c0_i32_1 = arith.constant 0 : i32
    return %arg0, %c0_i32, %c0_i32_0 : i32, i32, i32
  }
  func.func @transform_1(%arg0: i32) -> (i32, i32, i32) {
    %c0_i32 = arith.constant 0 : i32
    %c0_i32_0 = arith.constant 0 : i32
    %c0_i32_1 = arith.constant 0 : i32
    return %arg0, %c0_i32, %c0_i32_0 : i32, i32, i32
  }
  func.func @transform_2(%arg0: i32) -> (i32, i32, i32) {
    %c0_i32 = arith.constant 0 : i32
    %c0_i32_0 = arith.constant 0 : i32
    %c0_i32_1 = arith.constant 0 : i32
    return %arg0, %c0_i32, %c0_i32_0 : i32, i32, i32
  }
  func.func @transform_3(%arg0: i32) -> (i32, i32) {
    %c0_i32 = arith.constant 0 : i32
    %c0_i32_0 = arith.constant 0 : i32
    %c0_i32_1 = arith.constant 0 : i32
    return %c0_i32, %c0_i32_0 : i32, i32
  }
  func.func @transform_4(%arg0: i32) -> (i32, i32) {
    %c0_i32 = arith.constant 0 : i32
    %c0_i32_0 = arith.constant 0 : i32
    %c0_i32_1 = arith.constant 0 : i32
    return %c0_i32, %c0_i32_0 : i32, i32
  }
  func.func @transform_5(%arg0: i32) -> (i32, i32) {
    %c0_i32 = arith.constant 0 : i32
    %c0_i32_0 = arith.constant 0 : i32
    %c0_i32_1 = arith.constant 0 : i32
    return %c0_i32, %c0_i32_0 : i32, i32
  }
  func.func @transform_6(%arg0: i32) -> (i32, i32) {
    %c0_i32 = arith.constant 0 : i32
    %c0_i32_0 = arith.constant 0 : i32
    %c0_i32_1 = arith.constant 0 : i32
    return %c0_i32, %c0_i32_0 : i32, i32
  }
  func.func @transform_7(%arg0: i32) -> (i32, i32, i32) {
    %c0_i32 = arith.constant 0 : i32
    %c0_i32_0 = arith.constant 0 : i32
    %c0_i32_1 = arith.constant 0 : i32
    %c0_i32_2 = arith.constant 0 : i32
    return %c0_i32, %c0_i32_0, %c0_i32_1 : i32, i32, i32
  }
  func.func @transform_8(%arg0: i32) -> (i32, i32, i32) {
    %c0_i32 = arith.constant 0 : i32
    %c0_i32_0 = arith.constant 0 : i32
    %c0_i32_1 = arith.constant 0 : i32
    return %arg0, %c0_i32, %c0_i32_0 : i32, i32, i32
  }
}

</mosaic_0001>

<llo_original>
// kernel: tpu_custom_call.1
$region0: #{tpu_custom_call.1}
  #allocation0 [shape = 'u32[]', space=smem, size = 0x4, offset = 0x4, fixed_abs, tag = 'smem constant byte address 0x4 - core index']
  #allocation1 [shape = 'u32[144,128]{1,0:T(1,128)}', space=vmem, size = 0x12000, scoped, tag = 'internal scratch']
  #allocation2 [shape = 'f32[36,128]{1,0:T(8,128)}', space=vmem, size = 0x5000, scoped, tag = 'scratch operand']
  %s0 = inlined_call_operand.vmem [shape: f32[2,48,128], index: 0, kind: input, shape index: {}]
  %s1 = inlined_call_operand.vmem [shape: bf16[2,48,128], index: 1, kind: input, shape index: {}]
  %s2 = inlined_call_operand.vmem [shape: bf16[2,128,48], index: 2, kind: input, shape index: {}]
  %s3 = inlined_call_operand.vmem [shape: bf16[48,48], index: 3, kind: input, shape index: {}]
  %s4 = inlined_call_operand.vmem [shape: bf16[4,48], index: 4, kind: input, shape index: {}]
  %s5 = inlined_call_operand.vmem [shape: bf16[48,36], index: 5, kind: input, shape index: {}]
  %s6 = inlined_call_operand.vmem [shape: f32[48,1], index: 6, kind: input, shape index: {}]
  %s7 = inlined_call_operand.vmem [shape: f32[9,1,128], index: 7, kind: input, shape index: {}]
  %s8 = inlined_call_operand.hbm [shape: f32[2,48,128], index: 8, kind: output, shape index: {}]
  %s9 = sld [smem:[#allocation0]]
  $region65: #{tpu_custom_call.1} parent=0
    _
  %s11 = ssub.s32 1, %s9
  %s12 = scalar_select 0, %s11, %s9
  $region1: #{tpu_custom_call.1} parent=0
    #allocation3 [shape = 'u8[49152]{0}', space=vmem, size = 0xc000, scoped, tag = 'output window, operand 0']
    #allocation4 [shape = 's32[2]{0}', space=sflag, size = 0x8, scoped, tag = 'scoped memory for tpu_custom_call.1']
    %13 = vsyncpa [#allocation4], 0
    %s14 = scalar_lea.sflag [#allocation4], 1
    %15 = vsyncpa %s14, 0
    loop: start=0, step=1, limit=4
    $region2: #{tpu_custom_call.1} parent=1 // loop_pre_header
      _
    $region3: #{tpu_custom_call.1} parent=1 // loop_header
      %s17 = sphi 0, %s21
      %p18 = scmp.ge.s32.totalorder %s17, 4
      %s27 = sphi 0, %s29
      %s30 = sphi 0, %s27
      %s31 = sphi 0, %s30
      %s47 = sphi 0, %s31
      %s53 = sphi 0, %s55
      %s56 = sphi 0, %s53
      %s57 = sphi 0, %s56
      %s73 = sphi 0, %s57
      %s79 = sphi 0, %s81
      %s82 = sphi 0, %s79
      %s83 = sphi 0, %s82
      %s99 = sphi 0, %s83
      %s103 = sphi 0, %s103
      %s105 = sphi 0, %s103
      %s106 = sphi 0, %s105
      %s120 = sphi 0, %s106
      %s124 = sphi 0, %s124
      %s126 = sphi 0, %s124
      %s127 = sphi 0, %s126
      %s141 = sphi 0, %s127
      %s145 = sphi 0, %s145
      %s147 = sphi 0, %s145
      %s148 = sphi 0, %s147
      %s162 = sphi 0, %s148
      %s166 = sphi 0, %s166
      %s168 = sphi 0, %s166
      %s169 = sphi 0, %s168
      %s183 = sphi 0, %s169
      %s187 = sphi 0, %s187
      %s189 = sphi 0, %s187
      %s190 = sphi 0, %s189
      %s204 = sphi 0, %s190
      %s210 = sphi 0, %s212
      %s213 = sphi 0, %s210
      %s214 = sphi 0, %s213
      %s230 = sphi 0, %s214
    $region4: #{tpu_custom_call.1} parent=1 // loop_header_branch
      %20 = sbr.rel (%p18) target = $region8
    $region5: #{tpu_custom_call.1} parent=1 // loop_body
      %s22 = ssub.s32 %s17, 1
      %s23 = ssub.s32 %s17, 2
      %s24 = sadd.s32 %s17, 1
      %s25 = ssub.s32 %s17, %s24
      %p26 = scmp.eq.s32.totalorder %s25, 0
      %s28 = sadd.s32 %s27, 1
      %s29 = scalar_select %p26, %s27, %s28
      %p32 = pneg %p26
      %p33 = scmp.eq.s32.totalorder %s17, 1
      %p34 = por %p32, %p33
      %p35 = scmp.ne.s32.totalorder %s27, %s30
      %p36 = scmp.eq.s32.totalorder %s17, 0
      %p37 = por %p35, %p36
      %p38 = scmp.ne.s32.totalorder %s27, %s30
      %p39 = scmp.eq.s32.totalorder %s22, 1
      %p40 = por %p38, %p39
      %p41 = scmp.ne.s32.totalorder %s30, %s31
      %p42 = scmp.eq.s32.totalorder %s22, 0
      %p43 = por %p41, %p42
      %p44 = scmp.ne.s32.totalorder %s30, %s31
      %p45 = scmp.eq.s32.totalorder %s23, 1
      %p46 = por %p44, %p45
      %p48 = scmp.ne.s32.totalorder %s31, %s47
      %p49 = scmp.eq.s32.totalorder %s23, 0
      %p50 = por %p48, %p49
      %s51 = ssub.s32 %s17, %s24
      %p52 = scmp.eq.s32.totalorder %s51, 0
      %s54 = sadd.s32 %s53, 1
      %s55 = scalar_select %p52, %s53, %s54
      %p58 = pneg %p52
      %p59 = scmp.eq.s32.totalorder %s17, 1
      %p60 = por %p58, %p59
      %p61 = scmp.ne.s32.totalorder %s53, %s56
      %p62 = scmp.eq.s32.totalorder %s17, 0
      %p63 = por %p61, %p62
      %p64 = scmp.ne.s32.totalorder %s53, %s56
      %p65 = scmp.eq.s32.totalorder %s22, 1
      %p66 = por %p64, %p65
      %p67 = scmp.ne.s32.totalorder %s56, %s57
      %p68 = scmp.eq.s32.totalorder %s22, 0
      %p69 = por %p67, %p68
      %p70 = scmp.ne.s32.totalorder %s56, %s57
      %p71 = scmp.eq.s32.totalorder %s23, 1
      %p72 = por %p70, %p71
      %p74 = scmp.ne.s32.totalorder %s57, %s73
      %p75 = scmp.eq.s32.totalorder %s23, 0
      %p76 = por %p74, %p75
      %s77 = ssub.s32 %s17, %s24
      %p78 = scmp.eq.s32.totalorder %s77, 0
      %s80 = sadd.s32 %s79, 1
      %s81 = scalar_select %p78, %s79, %s80
      %p84 = pneg %p78
      %p85 = scmp.eq.s32.totalorder %s17, 1
      %p86 = por %p84, %p85
      %p87 = scmp.ne.s32.totalorder %s79, %s82
      %p88 = scmp.eq.s32.totalorder %s17, 0
      %p89 = por %p87, %p88
      %p90 = scmp.ne.s32.totalorder %s79, %s82
      %p91 = scmp.eq.s32.totalorder %s22, 1
      %p92 = por %p90, %p91
      %p93 = scmp.ne.s32.totalorder %s82, %s83
      %p94 = scmp.eq.s32.totalorder %s22, 0
      %p95 = por %p93, %p94
      %p96 = scmp.ne.s32.totalorder %s82, %s83
      %p97 = scmp.eq.s32.totalorder %s23, 1
      %p98 = por %p96, %p97
      %p100 = scmp.ne.s32.totalorder %s83, %s99
      %p101 = scmp.eq.s32.totalorder %s23, 0
      %p102 = por %p100, %p101
      %s104 = sadd.s32 %s103, 1
      %p107 = scmp.eq.s32.totalorder %s17, 1
      %p108 = scmp.ne.s32.totalorder %s103, %s105
      %p109 = scmp.eq.s32.totalorder %s17, 0
      %p110 = por %p108, %p109
      %p111 = scmp.ne.s32.totalorder %s103, %s105
      %p112 = scmp.eq.s32.totalorder %s22, 1
      %p113 = por %p111, %p112
      %p114 = scmp.ne.s32.totalorder %s105, %s106
      %p115 = scmp.eq.s32.totalorder %s22, 0
      %p116 = por %p114, %p115
      %p117 = scmp.ne.s32.totalorder %s105, %s106
      %p118 = scmp.eq.s32.totalorder %s23, 1
      %p119 = por %p117, %p118
      %p121 = scmp.ne.s32.totalorder %s106, %s120
      %p122 = scmp.eq.s32.totalorder %s23, 0
      %p123 = por %p121, %p122
      %s125 = sadd.s32 %s124, 1
      %p128 = scmp.eq.s32.totalorder %s17, 1
      %p129 = scmp.ne.s32.totalorder %s124, %s126
      %p130 = scmp.eq.s32.totalorder %s17, 0
      %p131 = por %p129, %p130
      %p132 = scmp.ne.s32.totalorder %s124, %s126
      %p133 = scmp.eq.s32.totalorder %s22, 1
      %p134 = por %p132, %p133
      %p135 = scmp.ne.s32.totalorder %s126, %s127
      %p136 = scmp.eq.s32.totalorder %s22, 0
      %p137 = por %p135, %p136
      %p138 = scmp.ne.s32.totalorder %s126, %s127
      %p139 = scmp.eq.s32.totalorder %s23, 1
      %p140 = por %p138, %p139
      %p142 = scmp.ne.s32.totalorder %s127, %s141
      %p143 = scmp.eq.s32.totalorder %s23, 0
      %p144 = por %p142, %p143
      %s146 = sadd.s32 %s145, 1
      %p149 = scmp.eq.s32.totalorder %s17, 1
      %p150 = scmp.ne.s32.totalorder %s145, %s147
      %p151 = scmp.eq.s32.totalorder %s17, 0
      %p152 = por %p150, %p151
      %p153 = scmp.ne.s32.totalorder %s145, %s147
      %p154 = scmp.eq.s32.totalorder %s22, 1
      %p155 = por %p153, %p154
      %p156 = scmp.ne.s32.totalorder %s147, %s148
      %p157 = scmp.eq.s32.totalorder %s22, 0
      %p158 = por %p156, %p157
      %p159 = scmp.ne.s32.totalorder %s147, %s148
      %p160 = scmp.eq.s32.totalorder %s23, 1
      %p161 = por %p159, %p160
      %p163 = scmp.ne.s32.totalorder %s148, %s162
      %p164 = scmp.eq.s32.totalorder %s23, 0
      %p165 = por %p163, %p164
      %s167 = sadd.s32 %s166, 1
      %p170 = scmp.eq.s32.totalorder %s17, 1
      %p171 = scmp.ne.s32.totalorder %s166, %s168
      %p172 = scmp.eq.s32.totalorder %s17, 0
      %p173 = por %p171, %p172
      %p174 = scmp.ne.s32.totalorder %s166, %s168
      %p175 = scmp.eq.s32.totalorder %s22, 1
      %p176 = por %p174, %p175
      %p177 = scmp.ne.s32.totalorder %s168, %s169
      %p178 = scmp.eq.s32.totalorder %s22, 0
      %p179 = por %p177, %p178
      %p180 = scmp.ne.s32.totalorder %s168, %s169
      %p181 = scmp.eq.s32.totalorder %s23, 1
      %p182 = por %p180, %p181
      %p184 = scmp.ne.s32.totalorder %s169, %s183
      %p185 = scmp.eq.s32.totalorder %s23, 0
      %p186 = por %p184, %p185
      %s188 = sadd.s32 %s187, 1
      %p191 = scmp.eq.s32.totalorder %s17, 1
      %p192 = scmp.ne.s32.totalorder %s187, %s189
      %p193 = scmp.eq.s32.totalorder %s17, 0
      %p194 = por %p192, %p193
      %p195 = scmp.ne.s32.totalorder %s187, %s189
      %p196 = scmp.eq.s32.totalorder %s22, 1
      %p197 = por %p195, %p196
      %p198 = scmp.ne.s32.totalorder %s189, %s190
      %p199 = scmp.eq.s32.totalorder %s22, 0
      %p200 = por %p198, %p199
      %p201 = scmp.ne.s32.totalorder %s189, %s190
      %p202 = scmp.eq.s32.totalorder %s23, 1
      %p203 = por %p201, %p202
      %p205 = scmp.ne.s32.totalorder %s190, %s204
      %p206 = scmp.eq.s32.totalorder %s23, 0
      %p207 = por %p205, %p206
      %s208 = ssub.s32 %s17, %s24
      %p209 = scmp.eq.s32.totalorder %s208, 0
      %s211 = sadd.s32 %s210, 1
      %s212 = scalar_select %p209, %s210, %s211
      %p215 = pneg %p209
      %p216 = scmp.eq.s32.totalorder %s17, 1
      %p217 = por %p215, %p216
      %p218 = scmp.ne.s32.totalorder %s210, %s213
      %p219 = scmp.eq.s32.totalorder %s17, 0
      %p220 = por %p218, %p219
      %p221 = scmp.ne.s32.totalorder %s210, %s213
      %p222 = scmp.eq.s32.totalorder %s22, 1
      %p223 = por %p221, %p222
      %p224 = scmp.ne.s32.totalorder %s213, %s214
      %p225 = scmp.eq.s32.totalorder %s22, 0
      %p226 = por %p224, %p225
      %p227 = scmp.ne.s32.totalorder %s213, %s214
      %p228 = scmp.eq.s32.totalorder %s23, 1
      %p229 = por %p227, %p228
      %p231 = scmp.ne.s32.totalorder %s214, %s230
      %p232 = scmp.eq.s32.totalorder %s23, 0
      %p233 = por %p231, %p232
      %p234 = scmp.le.s32.totalorder 1, %s17
      %p235 = scmp.lt.s32.totalorder %s17, 3
      %p236 = pnand %p234, %p235
      %p237 = pneg %p236
      // Predicated region
      $region9: #{tpu_custom_call.1} parent=5 // pred_check
        _
      $region10: #{tpu_custom_call.1} parent=5 // pred_check_branch
        %239 = sbr.rel (%p236) target = $region12
      $region11: #{tpu_custom_call.1} parent=5 // pred_region
        %s240 = ssub.s32 %s17, 1
        // Predicated region
        $region13: #{tpu_custom_call.1} parent=11 // pred_check
          %p241 = pneg %p116
        $region14: #{tpu_custom_call.1} parent=11 // pred_check_branch
          %243 = sbr.rel (%p241) target = $region16
        $region15: #{tpu_custom_call.1} parent=11 // pred_region
          _
        $region16: #{tpu_custom_call.1} parent=11 // pred_fallthru
          _
        // Predicated region
        $region17: #{tpu_custom_call.1} parent=11 // pred_check
          %p244 = pneg %p137
        $region18: #{tpu_custom_call.1} parent=11 // pred_check_branch
          %246 = sbr.rel (%p244) target = $region20
        $region19: #{tpu_custom_call.1} parent=11 // pred_region
          _
        $region20: #{tpu_custom_call.1} parent=11 // pred_fallthru
          _
        // Predicated region
        $region21: #{tpu_custom_call.1} parent=11 // pred_check
          %p247 = pneg %p158
        $region22: #{tpu_custom_call.1} parent=11 // pred_check_branch
          %249 = sbr.rel (%p247) target = $region24
        $region23: #{tpu_custom_call.1} parent=11 // pred_region
          _
        $region24: #{tpu_custom_call.1} parent=11 // pred_fallthru
          _
        // Predicated region
        $region25: #{tpu_custom_call.1} parent=11 // pred_check
          %p250 = pneg %p179
        $region26: #{tpu_custom_call.1} parent=11 // pred_check_branch
          %252 = sbr.rel (%p250) target = $region28
        $region27: #{tpu_custom_call.1} parent=11 // pred_region
          _
        $region28: #{tpu_custom_call.1} parent=11 // pred_fallthru
          _
        // Predicated region
        $region29: #{tpu_custom_call.1} parent=11 // pred_check
          %p253 = pneg %p200
        $region30: #{tpu_custom_call.1} parent=11 // pred_check_branch
          %255 = sbr.rel (%p253) target = $region32
        $region31: #{tpu_custom_call.1} parent=11 // pred_region
          _
        $region32: #{tpu_custom_call.1} parent=11 // pred_fallthru
          _
      $region12: #{tpu_custom_call.1} parent=5 // pred_fallthru
        _
      %p256 = scmp.lt.s32.totalorder %s17, 2
      // Predicated region
      $region33: #{tpu_custom_call.1} parent=5 // pred_check
        %p257 = pneg %p256
      $region34: #{tpu_custom_call.1} parent=5 // pred_check_branch
        %259 = sbr.rel (%p257) target = $region36
      $region35: #{tpu_custom_call.1} parent=5 // pred_region
        // Predicated region
        $region37: #{tpu_custom_call.1} parent=35 // pred_check
          %p260 = pneg %p37
        $region38: #{tpu_custom_call.1} parent=35 // pred_check_branch
          %262 = sbr.rel (%p260) target = $region40
        $region39: #{tpu_custom_call.1} parent=35 // pred_region
          %p263 = scmp.lt.s32.totalorder %s17, 1
          %s264 = scalar_select %p263, %s17, 1
          %s265 = smul.addr %s264, 6
          %s266 = smul.addr %s265, 8
          %s267 = scalar_lea.vmem %s0, %s266
        $region40: #{tpu_custom_call.1} parent=35 // pred_fallthru
          _
        // Predicated region
        $region41: #{tpu_custom_call.1} parent=35 // pred_check
          %p268 = pneg %p63
        $region42: #{tpu_custom_call.1} parent=35 // pred_check_branch
          %270 = sbr.rel (%p268) target = $region44
        $region43: #{tpu_custom_call.1} parent=35 // pred_region
          %p271 = scmp.lt.s32.totalorder %s17, 1
          %s272 = scalar_select %p271, %s17, 1
          %s273 = smul.addr %s272, 6
          %s274 = smul.addr %s273, 4
          %s275 = scalar_lea.vmem %s1, %s274
        $region44: #{tpu_custom_call.1} parent=35 // pred_fallthru
          _
        // Predicated region
        $region45: #{tpu_custom_call.1} parent=35 // pred_check
          %p276 = pneg %p89
        $region46: #{tpu_custom_call.1} parent=35 // pred_check_branch
          %278 = sbr.rel (%p276) target = $region48
        $region47: #{tpu_custom_call.1} parent=35 // pred_region
          %p279 = scmp.lt.s32.totalorder %s17, 1
          %s280 = scalar_select %p279, %s17, 1
          %s281 = smul.addr %s280, 16
          %s282 = smul.addr %s281, 4
          %s283 = scalar_lea.vmem %s2, %s282
        $region48: #{tpu_custom_call.1} parent=35 // pred_fallthru
          _
      $region36: #{tpu_custom_call.1} parent=5 // pred_fallthru
        _
      %p284 = scmp.le.s32.totalorder 1, %s17
      %p285 = scmp.lt.s32.totalorder %s17, 3
      %p286 = pnand %p284, %p285
      %p287 = pneg %p286
      // Predicated region
      $region49: #{tpu_custom_call.1} parent=5 // pred_check
        _
      $region50: #{tpu_custom_call.1} parent=5 // pred_check_branch
        %289 = sbr.rel (%p286) target = $region52
      $region51: #{tpu_custom_call.1} parent=5 // pred_region
        %s290 = ssub.s32 %s17, 1
        %p291 = scmp.lt.s32.totalorder %s22, 1
        %s292 = scalar_select %p291, %s22, 1
        %s293 = smul.addr %s292, 6
        %s294 = smul.addr %s293, 8
        %s295 = scalar_lea.vmem %s0, %s294
        %p296 = pneg %p43
        %p297 = pneg %p40
        %p298 = scmp.lt.s32.totalorder %s22, 1
        %s299 = scalar_select %p298, %s22, 1
        %s300 = smul.addr %s299, 6
        %s301 = smul.addr %s300, 4
        %s302 = scalar_lea.vmem %s1, %s301
        %p303 = pneg %p69
        %p304 = pneg %p66
        %p305 = scmp.lt.s32.totalorder %s22, 1
        %s306 = scalar_select %p305, %s22, 1
        %s307 = smul.addr %s306, 16
        %s308 = smul.addr %s307, 4
        %s309 = scalar_lea.vmem %s2, %s308
        %p310 = pneg %p95
        %p311 = pneg %p92
        %p312 = pneg %p116
        %p313 = pneg %p113
        %p314 = pneg %p137
        %p315 = pneg %p134
        %p316 = pneg %p158
        %p317 = pneg %p155
        %p318 = pneg %p179
        %p319 = pneg %p176
        %p320 = pneg %p200
        %p321 = pneg %p197
        %p322 = pneg %p226
        %p323 = pneg %p223
        %s324 = sand.u32 %s213, 1
        %s325 = scalar_lea.sflag [#allocation4], %s324
        %s326 = sand.u32 %s213, 1
        %s327 = smul.addr %s326, 48
        %s328 = scalar_lea.vmem [#allocation3], %s327
        %p329 = scmp.lt.s32.totalorder %s22, 1
        %s330 = scalar_select %p329, %s22, 1
        %s331 = smul.addr %s330, 6
        %s332 = smul.addr %s331, 8
        %s333 = scalar_lea.vmem %s0, %s332
        %p334 = scmp.lt.s32.totalorder %s22, 1
        %s335 = scalar_select %p334, %s22, 1
        %s336 = smul.addr %s335, 6
        %s337 = smul.addr %s336, 4
        %s338 = scalar_lea.vmem %s1, %s337
        %p339 = scmp.lt.s32.totalorder %s22, 1
        %s340 = scalar_select %p339, %s22, 1
        %s341 = smul.addr %s340, 16
        %s342 = smul.addr %s341, 4
        %s343 = scalar_lea.vmem %s2, %s342
        %v345 = vld [vmem:[%s333] sm:$0xff]
        %v346 = vld [vmem:[%s333 + $0x8] sm:$0xff]
        %v347 = vld [vmem:[%s333 + $0x10] sm:$0xff]
        %v348 = vld [vmem:[%s333 + $0x18] sm:$0xff]
        %v349 = vld [vmem:[%s333 + $0x20] sm:$0xff]
        %v350 = vld [vmem:[%s333 + $0x28] sm:$0xff]
        %v351 = vpack.c.bf16 %v346, %v345
        %v352 = vpack.c.bf16 %v348, %v347
        %v353 = vpack.c.bf16 %v350, %v349
        %v354 = vld [vmem:[%s338] sm:$0xf]
        %v355 = vld [vmem:[%s338 + $0x4] sm:$0xf]
        %v356 = vld [vmem:[%s338 + $0x8] sm:$0xf]
        %v357 = vld [vmem:[%s338 + $0xc] sm:$0xf]
        %v358 = vld [vmem:[%s338 + $0x10] sm:$0xf]
        %v359 = vld [vmem:[%s338 + $0x14] sm:$0xf]
        %v360 = vld [vmem:[%s343] sm:$0xf]
        %v361 = vld [vmem:[%s343 + $0x4] sm:$0xf]
        %v362 = vld [vmem:[%s343 + $0x8] sm:$0xf]
        %v363 = vld [vmem:[%s343 + $0xc] sm:$0xf]
        %v364 = vld [vmem:[%s343 + $0x10] sm:$0xf]
        %v365 = vld [vmem:[%s343 + $0x14] sm:$0xf]
        %v366 = vld [vmem:[%s343 + $0x18] sm:$0xf]
        %v367 = vld [vmem:[%s343 + $0x1c] sm:$0xf]
        %v368 = vld [vmem:[%s343 + $0x20] sm:$0xf]
        %v369 = vld [vmem:[%s343 + $0x24] sm:$0xf]
        %v370 = vld [vmem:[%s343 + $0x28] sm:$0xf]
        %v371 = vld [vmem:[%s343 + $0x2c] sm:$0xf]
        %v372 = vld [vmem:[%s343 + $0x30] sm:$0xf]
        %v373 = vld [vmem:[%s343 + $0x34] sm:$0xf]
        %v374 = vld [vmem:[%s343 + $0x38] sm:$0xf]
        %v375 = vld [vmem:[%s343 + $0x3c] sm:$0xf]
        %v376 = vld [vmem:[%s3] sm:$0xf]
        %v377 = vld [vmem:[%s3 + $0x4] sm:$0xf]
        %v378 = vld [vmem:[%s3 + $0x8] sm:$0xf]
        %v379 = vld [vmem:[%s3 + $0xc] sm:$0xf]
        %v380 = vld [vmem:[%s3 + $0x10] sm:$0xf]
        %v381 = vld [vmem:[%s3 + $0x14] sm:$0xf]
        %v398 = vunpack.c.l.b16 %v360
        %v399 = vunpack.c.l.b16 %v361
        %v400 = vunpack.c.l.b16 %v362
        %v401 = vunpack.c.l.b16 %v363
        %v402 = vunpack.c.l.b16 %v364
        %v403 = vunpack.c.l.b16 %v365
        %v404 = vunpack.c.l.b16 %v366
        %v405 = vunpack.c.l.b16 %v367
        %v406 = vunpack.c.l.b16 %v368
        %v407 = vunpack.c.l.b16 %v369
        %v408 = vunpack.c.l.b16 %v370
        %v409 = vunpack.c.l.b16 %v371
        %v410 = vunpack.c.l.b16 %v372
        %v411 = vunpack.c.l.b16 %v373
        %v412 = vunpack.c.l.b16 %v374
        %v413 = vunpack.c.l.b16 %v375
        %v414 = vpack.c.b16 %v399, %v398
        %v415 = vpack.c.b16 %v401, %v400
        %v416 = vpack.c.b16 %v403, %v402
        %v417 = vpack.c.b16 %v405, %v404
        %v418 = vpack.c.b16 %v407, %v406
        %v419 = vpack.c.b16 %v409, %v408
        %v420 = vpack.c.b16 %v411, %v410
        %v421 = vpack.c.b16 %v413, %v412
        %v428 = vunpack.c.l.b16 %v376
        %v429 = vunpack.c.l.b16 %v377
        %v430 = vunpack.c.l.b16 %v378
        %v431 = vunpack.c.l.b16 %v379
        %v432 = vunpack.c.l.b16 %v380
        %v433 = vunpack.c.l.b16 %v381
        %v434 = vpack.c.b16 %v429, %v428
        %v435 = vpack.c.b16 %v431, %v430
        %v436 = vpack.c.b16 %v433, %v432
        %vm440 = vcmask 392192
        %v442 = vsel %vm440, %v414, 0
        %v445 = vsel %vm440, %v415, 0
        %v448 = vsel %vm440, %v416, 0
        %v451 = vsel %vm440, %v417, 0
        %v454 = vsel %vm440, %v418, 0
        %v457 = vsel %vm440, %v419, 0
        %v460 = vsel %vm440, %v420, 0
        %v463 = vsel %vm440, %v421, 0
        %465 = vmatprep.subr.bf16.mxu0 0
        %466 = vmatpush1.bf16.msra.mxu0 %v434
        %467 = vmatprep.subr.bf16.mxu0 0
        %468 = vmatpush1.bf16.msra.mxu0 %v435
        %469 = vmatprep.subr.bf16.mxu0 0
        %470 = vmatpush1.bf16.msra.mxu0 %v436
        %471 = vmatprep.subr.bf16.mxu0 0
        %472 = vmatpush1.bf16.msra.mxu0 0
        %473 = vmatprep.subr.bf16.mxu0 0
        %474 = vmatpush1.bf16.msra.mxu0 0
        %475 = vmatprep.subr.bf16.mxu0 0
        %476 = vmatpush1.bf16.msra.mxu0 0
        %477 = vmatprep.subr.bf16.mxu0 0
        %478 = vmatpush1.bf16.msra.mxu0 0
        %479 = vmatprep.subr.bf16.mxu0 0
        %480 = vmatpush1.bf16.msra.mxu0 0
        %481 = vmatprep.subr.bf16.mxu0 0
        %482 = vmatpush1.bf16.msra.mxu0 0
        %483 = vmatprep.subr.bf16.mxu0 0
        %484 = vmatpush1.bf16.msra.mxu0 0
        %485 = vmatprep.subr.bf16.mxu0 0
        %486 = vmatpush1.bf16.msra.mxu0 0
        %487 = vmatprep.subr.bf16.mxu0 0
        %488 = vmatpush1.bf16.msra.mxu0 0
        %489 = vmatprep.subr.bf16.mxu0 0
        %490 = vmatpush1.bf16.msra.mxu0 0
        %491 = vmatprep.subr.bf16.mxu0 0
        %492 = vmatpush1.bf16.msra.mxu0 0
        %493 = vmatprep.subr.bf16.mxu0 0
        %494 = vmatpush1.bf16.msra.mxu0 0
        %495 = vmatprep.subr.bf16.mxu0 0
        %496 = vmatpush1.bf16.msra.mxu0 0
        %497 = vmatprep.mubr.bf16.mxu0 0
        %498 = vmatmul.mubr.bf16.gmra.mrb[0].mxu0 %v442
        %v499 = vpop.f32.mrb[0].mxu0
        %v500 = vadd.f32 0.0, %v499
        %v501 = vpop.f32.mrb[0].mxu0
        %v502 = vpop.f32.mrb[0].mxu0
        %v503 = vadd.f32 0.0, %v502
        %v504 = vpop.f32.mrb[0].mxu0
        %505 = vmatprep.mubr.bf16.mxu0 0
        %506 = vmatmul.mubr.bf16.gmra.mrb[0].mxu0 %v445
        %v507 = vpop.f32.mrb[0].mxu0
        %v508 = vadd.f32 0.0, %v507
        %v509 = vpop.f32.mrb[0].mxu0
        %v510 = vpop.f32.mrb[0].mxu0
        %v511 = vadd.f32 0.0, %v510
        %v512 = vpop.f32.mrb[0].mxu0
        %513 = vmatprep.mubr.bf16.mxu0 0
        %514 = vmatmul.mubr.bf16.gmra.mrb[0].mxu0 %v448
        %v515 = vpop.f32.mrb[0].mxu0
        %v516 = vadd.f32 0.0, %v515
        %v517 = vpop.f32.mrb[0].mxu0
        %v518 = vpop.f32.mrb[0].mxu0
        %v519 = vadd.f32 0.0, %v518
        %v520 = vpop.f32.mrb[0].mxu0
        %521 = vmatprep.mubr.bf16.mxu0 0
        %522 = vmatmul.mubr.bf16.gmra.mrb[0].mxu0 %v451
        %v523 = vpop.f32.mrb[0].mxu0
        %v524 = vadd.f32 0.0, %v523
        %v525 = vpop.f32.mrb[0].mxu0
        %v526 = vpop.f32.mrb[0].mxu0
        %v527 = vadd.f32 0.0, %v526
        %v528 = vpop.f32.mrb[0].mxu0
        %529 = vmatprep.mubr.bf16.mxu0 0
        %530 = vmatmul.mubr.bf16.gmra.mrb[0].mxu0 %v454
        %v531 = vpop.f32.mrb[0].mxu0
        %v532 = vadd.f32 0.0, %v531
        %v533 = vpop.f32.mrb[0].mxu0
        %v534 = vpop.f32.mrb[0].mxu0
        %v535 = vadd.f32 0.0, %v534
        %v536 = vpop.f32.mrb[0].mxu0
        %537 = vmatprep.mubr.bf16.mxu0 0
        %538 = vmatmul.mubr.bf16.gmra.mrb[0].mxu0 %v457
        %v539 = vpop.f32.mrb[0].mxu0
        %v540 = vadd.f32 0.0, %v539
        %v541 = vpop.f32.mrb[0].mxu0
        %v542 = vpop.f32.mrb[0].mxu0
        %v543 = vadd.f32 0.0, %v542
        %v544 = vpop.f32.mrb[0].mxu0
        %545 = vmatprep.mubr.bf16.mxu0 0
        %546 = vmatmul.mubr.bf16.gmra.mrb[0].mxu0 %v460
        %v547 = vpop.f32.mrb[0].mxu0
        %v548 = vadd.f32 0.0, %v547
        %v549 = vpop.f32.mrb[0].mxu0
        %v550 = vpop.f32.mrb[0].mxu0
        %v551 = vadd.f32 0.0, %v550
        %v552 = vpop.f32.mrb[0].mxu0
        %553 = vmatprep.mubr.bf16.mxu0 0
        %554 = vmatmul.mubr.bf16.gmra.mrb[0].mxu0 %v463
        %v555 = vpop.f32.mrb[0].mxu0
        %v556 = vadd.f32 0.0, %v555
        %v557 = vpop.f32.mrb[0].mxu0
        %v558 = vpop.f32.mrb[0].mxu0
        %v559 = vadd.f32 0.0, %v558
        %v560 = vpop.f32.mrb[0].mxu0
        %561 = vdwg.mxu0
        %v562 = vpack.c.bf16 %v503, %v500
        %v563 = vpack.c.bf16 %v511, %v508
        %v564 = vpack.c.bf16 %v519, %v516
        %v565 = vpack.c.bf16 %v527, %v524
        %v566 = vpack.c.bf16 %v535, %v532
        %v567 = vpack.c.bf16 %v543, %v540
        %v568 = vpack.c.bf16 %v551, %v548
        %v569 = vpack.c.bf16 %v559, %v556
        %v571 = vsel %vm440, %v562, 0
        %v574 = vsel %vm440, %v563, 0
        %v577 = vsel %vm440, %v564, 0
        %v580 = vsel %vm440, %v565, 0
        %v583 = vsel %vm440, %v566, 0
        %v586 = vsel %vm440, %v567, 0
        %v589 = vsel %vm440, %v568, 0
        %v592 = vsel %vm440, %v569, 0
        %594 = vmatprep.subr.bf16.mxu0 0
        %595 = vmatpush1.bf16.msra.mxu0 %v351
        %596 = vmatprep.subr.bf16.mxu0 0
        %597 = vmatpush1.bf16.msra.mxu0 %v352
        %598 = vmatprep.subr.bf16.mxu0 0
        %599 = vmatpush1.bf16.msra.mxu0 %v353
        %600 = vmatprep.subr.bf16.mxu0 0
        %601 = vmatpush1.bf16.msra.mxu0 0
        %602 = vmatprep.subr.bf16.mxu0 0
        %603 = vmatpush1.bf16.msra.mxu0 0
        %604 = vmatprep.subr.bf16.mxu0 0
        %605 = vmatpush1.bf16.msra.mxu0 0
        %606 = vmatprep.subr.bf16.mxu0 0
        %607 = vmatpush1.bf16.msra.mxu0 0
        %608 = vmatprep.subr.bf16.mxu0 0
        %609 = vmatpush1.bf16.msra.mxu0 0
        %610 = vmatprep.subr.bf16.mxu0 0
        %611 = vmatpush1.bf16.msra.mxu0 0
        %612 = vmatprep.subr.bf16.mxu0 0
        %613 = vmatpush1.bf16.msra.mxu0 0
        %614 = vmatprep.subr.bf16.mxu0 0
        %615 = vmatpush1.bf16.msra.mxu0 0
        %616 = vmatprep.subr.bf16.mxu0 0
        %617 = vmatpush1.bf16.msra.mxu0 0
        %618 = vmatprep.subr.bf16.mxu0 0
        %619 = vmatpush1.bf16.msra.mxu0 0
        %620 = vmatprep.subr.bf16.mxu0 0
        %621 = vmatpush1.bf16.msra.mxu0 0
        %622 = vmatprep.subr.bf16.mxu0 0
        %623 = vmatpush1.bf16.msra.mxu0 0
        %624 = vmatprep.subr.bf16.mxu0 0
        %625 = vmatpush1.bf16.msra.mxu0 0
        %626 = vmatprep.mubr.bf16.mxu0 0
        %627 = vmatmul.mubr.bf16.gmra.mrb[0].mxu0 %v571
        %v628 = vpop.f32.mrb[0].mxu0
        %v629 = vadd.f32 0.0, %v628
        %v630 = vpop.f32.mrb[0].mxu0
        %v631 = vpop.f32.mrb[0].mxu0
        %v632 = vadd.f32 0.0, %v631
        %v633 = vpop.f32.mrb[0].mxu0
        %634 = vmatprep.mubr.bf16.mxu0 0
        %635 = vmatmul.mubr.bf16.gmra.mrb[0].mxu0 %v574
        %v636 = vpop.f32.mrb[0].mxu0
        %v637 = vadd.f32 0.0, %v636
        %v638 = vpop.f32.mrb[0].mxu0
        %v639 = vpop.f32.mrb[0].mxu0
        %v640 = vadd.f32 0.0, %v639
        %v641 = vpop.f32.mrb[0].mxu0
        %642 = vmatprep.mubr.bf16.mxu0 0
        %643 = vmatmul.mubr.bf16.gmra.mrb[0].mxu0 %v577
        %v644 = vpop.f32.mrb[0].mxu0
        %v645 = vadd.f32 0.0, %v644
        %v646 = vpop.f32.mrb[0].mxu0
        %v647 = vpop.f32.mrb[0].mxu0
        %v648 = vadd.f32 0.0, %v647
        %v649 = vpop.f32.mrb[0].mxu0
        %650 = vmatprep.mubr.bf16.mxu0 0
        %651 = vmatmul.mubr.bf16.gmra.mrb[0].mxu0 %v580
        %v652 = vpop.f32.mrb[0].mxu0
        %v653 = vadd.f32 0.0, %v652
        %v654 = vpop.f32.mrb[0].mxu0
        %v655 = vpop.f32.mrb[0].mxu0
        %v656 = vadd.f32 0.0, %v655
        %v657 = vpop.f32.mrb[0].mxu0
        %658 = vmatprep.mubr.bf16.mxu0 0
        %659 = vmatmul.mubr.bf16.gmra.mrb[0].mxu0 %v583
        %v660 = vpop.f32.mrb[0].mxu0
        %v661 = vadd.f32 0.0, %v660
        %v662 = vpop.f32.mrb[0].mxu0
        %v663 = vpop.f32.mrb[0].mxu0
        %v664 = vadd.f32 0.0, %v663
        %v665 = vpop.f32.mrb[0].mxu0
        %666 = vmatprep.mubr.bf16.mxu0 0
        %667 = vmatmul.mubr.bf16.gmra.mrb[0].mxu0 %v586
        %v668 = vpop.f32.mrb[0].mxu0
        %v669 = vadd.f32 0.0, %v668
        %v670 = vpop.f32.mrb[0].mxu0
        %v671 = vpop.f32.mrb[0].mxu0
        %v672 = vadd.f32 0.0, %v671
        %v673 = vpop.f32.mrb[0].mxu0
        %674 = vmatprep.mubr.bf16.mxu0 0
        %675 = vmatmul.mubr.bf16.gmra.mrb[0].mxu0 %v589
        %v676 = vpop.f32.mrb[0].mxu0
        %v677 = vadd.f32 0.0, %v676
        %v678 = vpop.f32.mrb[0].mxu0
        %v679 = vpop.f32.mrb[0].mxu0
        %v680 = vadd.f32 0.0, %v679
        %v681 = vpop.f32.mrb[0].mxu0
        %682 = vmatprep.mubr.bf16.mxu0 0
        %683 = vmatmul.mubr.bf16.gmra.mrb[0].mxu0 %v592
        %v684 = vpop.f32.mrb[0].mxu0
        %v685 = vadd.f32 0.0, %v684
        %v686 = vpop.f32.mrb[0].mxu0
        %v687 = vpop.f32.mrb[0].mxu0
        %v688 = vadd.f32 0.0, %v687
        %v689 = vpop.f32.mrb[0].mxu0
        %690 = vdwg.mxu0
        %v691 = vlaneseq
        %v692 = vshrl.u32 %v691, 7
        %v693 = vadd.s32 %v692, 8
        %v694 = vadd.s32 %v692, 16
        %v695 = vadd.s32 %v692, 24
        %v696 = vadd.s32 %v692, 32
        %v697 = vadd.s32 %v692, 40
        %v698 = vadd.s32 %v692, 48
        %v699 = vadd.s32 %v692, 56
        %v700 = vadd.s32 %v692, 64
        %v701 = vadd.s32 %v692, 72
        %v702 = vadd.s32 %v692, 80
        %v703 = vadd.s32 %v692, 88
        %v704 = vadd.s32 %v692, 96
        %v705 = vadd.s32 %v692, 104
        %v706 = vadd.s32 %v692, 112
        %v707 = vadd.s32 %v692, 120
        %v708 = vlaneseq
        %v709 = vand.u32 %v708, 127
        %vm710 = vcmp.lt.s32.totalorder %v692, 64
        %vm711 = vcmp.lt.s32.totalorder %v693, 64
        %vm712 = vcmp.lt.s32.totalorder %v694, 64
        %vm713 = vcmp.lt.s32.totalorder %v695, 64
        %vm714 = vcmp.lt.s32.totalorder %v696, 64
        %vm715 = vcmp.lt.s32.totalorder %v697, 64
        %vm716 = vcmp.lt.s32.totalorder %v698, 64
        %vm717 = vcmp.lt.s32.totalorder %v699, 64
        %vm718 = vcmp.lt.s32.totalorder %v700, 64
        %vm719 = vcmp.lt.s32.totalorder %v701, 64
        %vm720 = vcmp.lt.s32.totalorder %v702, 64
        %vm721 = vcmp.lt.s32.totalorder %v703, 64
        %vm722 = vcmp.lt.s32.totalorder %v704, 64
        %vm723 = vcmp.lt.s32.totalorder %v705, 64
        %vm724 = vcmp.lt.s32.totalorder %v706, 64
        %vm725 = vcmp.lt.s32.totalorder %v707, 64
        %vm726 = vcmp.lt.s32.totalorder %v709, 64
        %vm727 = vmxor %vm710, %vm726
        %vm728 = vmxor %vm711, %vm726
        %vm729 = vmxor %vm712, %vm726
        %vm730 = vmxor %vm713, %vm726
        %vm731 = vmxor %vm714, %vm726
        %vm732 = vmxor %vm715, %vm726
        %vm733 = vmxor %vm716, %vm726
        %vm734 = vmxor %vm717, %vm726
        %vm735 = vmxor %vm718, %vm726
        %vm736 = vmxor %vm719, %vm726
        %vm737 = vmxor %vm720, %vm726
        %vm738 = vmxor %vm721, %vm726
        %vm739 = vmxor %vm722, %vm726
        %vm740 = vmxor %vm723, %vm726
        %vm741 = vmxor %vm724, %vm726
        %vm742 = vmxor %vm725, %vm726
        %vm743 = vmxor %vm727, 1
        %vm744 = vmxor %vm728, 1
        %vm745 = vmxor %vm729, 1
        %vm746 = vmxor %vm730, 1
        %vm747 = vmxor %vm731, 1
        %vm748 = vmxor %vm732, 1
        %vm749 = vmxor %vm733, 1
        %vm750 = vmxor %vm734, 1
        %vm751 = vmxor %vm735, 1
        %vm752 = vmxor %vm736, 1
        %vm753 = vmxor %vm737, 1
        %vm754 = vmxor %vm738, 1
        %vm755 = vmxor %vm739, 1
        %vm756 = vmxor %vm740, 1
        %vm757 = vmxor %vm741, 1
        %vm758 = vmxor %vm742, 1
        %v759 = vsel %vm743, %v629, -1e+30
        %v760 = vsel %vm744, %v632, -1e+30
        %v761 = vsel %vm745, %v637, -1e+30
        %v762 = vsel %vm746, %v640, -1e+30
        %v763 = vsel %vm747, %v645, -1e+30
        %v764 = vsel %vm748, %v648, -1e+30
        %v765 = vsel %vm749, %v653, -1e+30
        %v766 = vsel %vm750, %v656, -1e+30
        %v767 = vsel %vm751, %v661, -1e+30
        %v768 = vsel %vm752, %v664, -1e+30
        %v769 = vsel %vm753, %v669, -1e+30
        %v770 = vsel %vm754, %v672, -1e+30
        %v771 = vsel %vm755, %v677, -1e+30
        %v772 = vsel %vm756, %v680, -1e+30
        %v773 = vsel %vm757, %v685, -1e+30
        %v774 = vsel %vm758, %v688, -1e+30
        %v775 = vmax.f32 %v759, %v763
        %v776 = vmax.f32 %v760, %v764
        %v777 = vmax.f32 %v761, %v765
        %v778 = vmax.f32 %v762, %v766
        %v779 = vmax.f32 %v775, %v767
        %v780 = vmax.f32 %v776, %v768
        %v781 = vmax.f32 %v777, %v769
        %v782 = vmax.f32 %v778, %v770
        %v783 = vmax.f32 %v779, %v771
        %v784 = vmax.f32 %v780, %v772
        %v785 = vmax.f32 %v781, %v773
        %v786 = vmax.f32 %v782, %v774
        %v787 = vmax.f32 %v783, %v784
        %v788 = vmax.f32 %v785, %v786
        %v789 = vmax.f32 %v787, %v788
        %v790 = vrot.slane %v789, 4
        %v791 = vmax.f32 %v789, %v790
        %v792 = vrot.slane %v791, 2
        %v793 = vmax.f32 %v791, %v792
        %v794 = vrot.slane %v793, 1
        %v795 = vmax.f32 %v793, %v794
        %v796 = vsub.f32 %v759, %v795
        %v797 = vsub.f32 %v760, %v795
        %v798 = vsub.f32 %v761, %v795
        %v799 = vsub.f32 %v762, %v795
        %v800 = vsub.f32 %v763, %v795
        %v801 = vsub.f32 %v764, %v795
        %v802 = vsub.f32 %v765, %v795
        %v803 = vsub.f32 %v766, %v795
        %v804 = vsub.f32 %v767, %v795
        %v805 = vsub.f32 %v768, %v795
        %v806 = vsub.f32 %v769, %v795
        %v807 = vsub.f32 %v770, %v795
        %v808 = vsub.f32 %v771, %v795
        %v809 = vsub.f32 %v772, %v795
        %v810 = vsub.f32 %v773, %v795
        %v811 = vsub.f32 %v774, %v795
        %v812 = vmul.f32 %v796, 1.442695
        %v813 = vpow.pop %v812
        %v814 = vmul.f32 %v797, 1.442695
        %v815 = vpow.pop %v814
        %v816 = vmul.f32 %v798, 1.442695
        %v817 = vpow.pop %v816
        %v818 = vmul.f32 %v799, 1.442695
        %v819 = vpow.pop %v818
        %v820 = vmul.f32 %v800, 1.442695
        %v821 = vpow.pop %v820
        %v822 = vmul.f32 %v801, 1.442695
        %v823 = vpow.pop %v822
        %v824 = vmul.f32 %v802, 1.442695
        %v825 = vpow.pop %v824
        %v826 = vmul.f32 %v803, 1.442695
        %v827 = vpow.pop %v826
        %v828 = vmul.f32 %v804, 1.442695
        %v829 = vpow.pop %v828
        %v830 = vmul.f32 %v805, 1.442695
        %v831 = vpow.pop %v830
        %v832 = vmul.f32 %v806, 1.442695
        %v833 = vpow.pop %v832
        %v834 = vmul.f32 %v807, 1.442695
        %v835 = vpow.pop %v834
        %v836 = vmul.f32 %v808, 1.442695
        %v837 = vpow.pop %v836
        %v838 = vmul.f32 %v809, 1.442695
        %v839 = vpow.pop %v838
        %v840 = vmul.f32 %v810, 1.442695
        %v841 = vpow.pop %v840
        %v842 = vmul.f32 %v811, 1.442695
        %v843 = vpow.pop %v842
        %v844 = vadd.f32 %v813, %v815
        %v845 = vadd.f32 %v844, %v817
        %v846 = vadd.f32 %v845, %v819
        %v847 = vadd.f32 %v846, %v821
        %v848 = vadd.f32 %v847, %v823
        %v849 = vadd.f32 %v848, %v825
        %v850 = vadd.f32 %v849, %v827
        %v851 = vadd.f32 %v850, %v829
        %v852 = vadd.f32 %v851, %v831
        %v853 = vadd.f32 %v852, %v833
        %v854 = vadd.f32 %v853, %v835
        %v855 = vadd.f32 %v854, %v837
        %v856 = vadd.f32 %v855, %v839
        %v857 = vadd.f32 %v856, %v841
        %v858 = vadd.f32 %v857, %v843
        %v859 = vrot.slane %v858, 4
        %v860 = vadd.f32 %v858, %v859
        %v861 = vrot.slane %v860, 2
        %v862 = vadd.f32 %v860, %v861
        %v863 = vrot.slane %v862, 1
        %v864 = vadd.f32 %v862, %v863
        %v865 = vld [vmem:[%s4] sm:$0x3]
        %v872 = vunpack.c.l.b16 %v354
        %v873 = vunpack.c.l.b16 %v355
        %v874 = vunpack.c.l.b16 %v356
        %v875 = vunpack.c.l.b16 %v357
        %v876 = vunpack.c.l.b16 %v358
        %v877 = vunpack.c.l.b16 %v359
        %v878 = vpack.c.b16 %v873, %v872
        %v879 = vpack.c.b16 %v875, %v874
        %v880 = vpack.c.b16 %v877, %v876
        %v885 = vsel %vm440, %v865, 0
        %887 = vmatprep.subr.bf16.mxu0 0
        %888 = vmatpush1.bf16.msra.mxu0 %v878
        %889 = vmatprep.subr.bf16.mxu0 0
        %890 = vmatpush1.bf16.msra.mxu0 %v879
        %891 = vmatprep.subr.bf16.mxu0 0
        %892 = vmatpush1.bf16.msra.mxu0 %v880
        %893 = vmatprep.subr.bf16.mxu0 0
        %894 = vmatpush1.bf16.msra.mxu0 0
        %895 = vmatprep.subr.bf16.mxu0 0
        %896 = vmatpush1.bf16.msra.mxu0 0
        %897 = vmatprep.subr.bf16.mxu0 0
        %898 = vmatpush1.bf16.msra.mxu0 0
        %899 = vmatprep.subr.bf16.mxu0 0
        %900 = vmatpush1.bf16.msra.mxu0 0
        %901 = vmatprep.subr.bf16.mxu0 0
        %902 = vmatpush1.bf16.msra.mxu0 0
        %903 = vmatprep.subr.bf16.mxu0 0
        %904 = vmatpush1.bf16.msra.mxu0 0
        %905 = vmatprep.subr.bf16.mxu0 0
        %906 = vmatpush1.bf16.msra.mxu0 0
        %907 = vmatprep.subr.bf16.mxu0 0
        %908 = vmatpush1.bf16.msra.mxu0 0
        %909 = vmatprep.subr.bf16.mxu0 0
        %910 = vmatpush1.bf16.msra.mxu0 0
        %911 = vmatprep.subr.bf16.mxu0 0
        %912 = vmatpush1.bf16.msra.mxu0 0
        %913 = vmatprep.subr.bf16.mxu0 0
        %914 = vmatpush1.bf16.msra.mxu0 0
        %915 = vmatprep.subr.bf16.mxu0 0
        %916 = vmatpush1.bf16.msra.mxu0 0
        %917 = vmatprep.subr.bf16.mxu0 0
        %918 = vmatpush1.bf16.msra.mxu0 0
        %919 = vmatprep.mubr.bf16.mxu0 0
        %920 = vmatmul.mubr.bf16.gmra.mrb[0].mxu0 %v885
        %v921 = vpop.f32.mrb[0].mxu0
        %v922 = vadd.f32 0.0, %v921
        %v923 = vpop.f32.mrb[0].mxu0
        %v924 = vpop.f32.mrb[0].mxu0
        %v925 = vpop.f32.mrb[0].mxu0
        %926 = vdwg.mxu0
        %v927 = vpack.c.bf16 %v922, %v922
        %v928 = vpack.c.bf16 %v815, %v813
        %v929 = vpack.c.bf16 %v819, %v817
        %v930 = vpack.c.bf16 %v823, %v821
        %v931 = vpack.c.bf16 %v827, %v825
        %v932 = vpack.c.bf16 %v831, %v829
        %v933 = vpack.c.bf16 %v835, %v833
        %v934 = vpack.c.bf16 %v839, %v837
        %v935 = vpack.c.bf16 %v843, %v841
        %936 = vmatprep.subr.bf16.mxu0 0
        %937 = vmatpush1.bf16.msra.mxu0 %v928
        %938 = vmatprep.subr.bf16.mxu0 0
        %939 = vmatpush1.bf16.msra.mxu0 %v929
        %940 = vmatprep.subr.bf16.mxu0 0
        %941 = vmatpush1.bf16.msra.mxu0 %v930
        %942 = vmatprep.subr.bf16.mxu0 0
        %943 = vmatpush1.bf16.msra.mxu0 %v931
        %944 = vmatprep.subr.bf16.mxu0 0
        %945 = vmatpush1.bf16.msra.mxu0 %v932
        %946 = vmatprep.subr.bf16.mxu0 0
        %947 = vmatpush1.bf16.msra.mxu0 %v933
        %948 = vmatprep.subr.bf16.mxu0 0
        %949 = vmatpush1.bf16.msra.mxu0 %v934
        %950 = vmatprep.subr.bf16.mxu0 0
        %951 = vmatpush1.bf16.msra.mxu0 %v935
        %952 = vmatprep.subr.bf16.mxu0 0
        %953 = vmatpush1.bf16.msra.mxu0 0
        %954 = vmatprep.subr.bf16.mxu0 0
        %955 = vmatpush1.bf16.msra.mxu0 0
        %956 = vmatprep.subr.bf16.mxu0 0
        %957 = vmatpush1.bf16.msra.mxu0 0
        %958 = vmatprep.subr.bf16.mxu0 0
        %959 = vmatpush1.bf16.msra.mxu0 0
        %960 = vmatprep.subr.bf16.mxu0 0
        %961 = vmatpush1.bf16.msra.mxu0 0
        %962 = vmatprep.subr.bf16.mxu0 0
        %963 = vmatpush1.bf16.msra.mxu0 0
        %964 = vmatprep.subr.bf16.mxu0 0
        %965 = vmatpush1.bf16.msra.mxu0 0
        %966 = vmatprep.subr.bf16.mxu0 0
        %967 = vmatpush1.bf16.msra.mxu0 0
        %968 = vmatprep.mubr.bf16.mxu0 0
        %969 = vmatmul.mubr.bf16.gmra.mrb[0].mxu0 %v927
        %v970 = vpop.f32.mrb[0].mxu0
        %v971 = vadd.f32 0.0, %v970
        %v972 = vpop.f32.mrb[0].mxu0
        %v973 = vpop.f32.mrb[0].mxu0
        %v974 = vpop.f32.mrb[0].mxu0
        %975 = vdwg.mxu0
        %v976 = vrcp.pop %v864
        %v977 = vmul.f32 %v971, %v976
        %978 = vrot.lane.b32.xlu0 %v977, 9
        %v979 = vpop.permute.xlu0 %978
        %v980 = vld [vmem:[%s7] sm:$0x1]
        %v982 = vlaneseq
        %v983 = vshrl.u32 %v982, 7
        %v984 = vsub.s32 0, %v983
        %v985 = vrot.slane %v980, %v984
        %v987 = vmul.f32 %v979, %v985
        %988 = vst [vmem:[#allocation2] sm:$0xf] %v987
        %989 = vrot.lane.b32.xlu0 %v977, 8
        %v990 = vpop.permute.xlu0 %989
        %s991 = scalar_lea.vmem %s7, 1
        %v992 = vld [vmem:[%s991] sm:$0x1]
        %v994 = vlaneseq
        %v995 = vshrl.u32 %v994, 7
        %v996 = vsub.s32 0, %v995
        %v997 = vrot.slane %v992, %v996
        %v999 = vmul.f32 %v990, %v997
        %1000 = vst [vmem:[#allocation2 + $0x4] sm:$0xf] %v999
        %1001 = vrot.lane.b32.xlu0 %v977, 7
        %v1002 = vpop.permute.xlu0 %1001
        %s1003 = scalar_lea.vmem %s7, 2
        %v1004 = vld [vmem:[%s1003] sm:$0x1]
        %v1006 = vlaneseq
        %v1007 = vshrl.u32 %v1006, 7
        %v1008 = vsub.s32 0, %v1007
        %v1009 = vrot.slane %v1004, %v1008
        %v1011 = vmul.f32 %v1002, %v1009
        %1012 = vst [vmem:[#allocation2 + $0x8] sm:$0xf] %v1011
        %1013 = vrot.lane.b32.xlu0 %v977, 1
        %v1014 = vpop.permute.xlu0 %1013
        %s1015 = scalar_lea.vmem %s7, 3
        %v1016 = vld [vmem:[%s1015] sm:$0x1]
        %v1018 = vlaneseq
        %v1019 = vshrl.u32 %v1018, 7
        %v1020 = vsub.s32 0, %v1019
        %v1021 = vrot.slane %v1016, %v1020
        %v1023 = vmul.f32 %v1014, %v1021
        %1024 = vst [vmem:[#allocation2 + $0xc] sm:$0xf] %v1023
        %s1025 = scalar_lea.vmem %s7, 4
        %v1026 = vld [vmem:[%s1025] sm:$0x1]
        %v1028 = vlaneseq
        %v1029 = vshrl.u32 %v1028, 7
        %v1030 = vsub.s32 0, %v1029
        %v1031 = vrot.slane %v1026, %v1030
        %v1033 = vmul.f32 %v977, %v1031
        %1034 = vst [vmem:[#allocation2 + $0x10] sm:$0xf] %v1033
        %1035 = vrot.lane.b32.xlu0 %v977, 127
        %v1036 = vpop.permute.xlu0 %1035
        %s1037 = scalar_lea.vmem %s7, 5
        %v1038 = vld [vmem:[%s1037] sm:$0x1]
        %v1040 = vlaneseq
        %v1041 = vshrl.u32 %v1040, 7
        %v1042 = vsub.s32 0, %v1041
        %v1043 = vrot.slane %v1038, %v1042
        %v1045 = vmul.f32 %v1036, %v1043
        %1046 = vst [vmem:[#allocation2 + $0x14] sm:$0xf] %v1045
        %1047 = vrot.lane.b32.xlu0 %v977, 121
        %v1048 = vpop.permute.xlu0 %1047
        %s1049 = scalar_lea.vmem %s7, 6
        %v1050 = vld [vmem:[%s1049] sm:$0x1]
        %v1052 = vlaneseq
        %v1053 = vshrl.u32 %v1052, 7
        %v1054 = vsub.s32 0, %v1053
        %v1055 = vrot.slane %v1050, %v1054
        %v1057 = vmul.f32 %v1048, %v1055
        %1058 = vst [vmem:[#allocation2 + $0x18] sm:$0xf] %v1057
        %1059 = vrot.lane.b32.xlu0 %v977, 120
        %v1060 = vpop.permute.xlu0 %1059
        %s1061 = scalar_lea.vmem %s7, 7
        %v1062 = vld [vmem:[%s1061] sm:$0x1]
        %v1064 = vlaneseq
        %v1065 = vshrl.u32 %v1064, 7
        %v1066 = vsub.s32 0, %v1065
        %v1067 = vrot.slane %v1062, %v1066
        %v1069 = vmul.f32 %v1060, %v1067
        %1070 = vst [vmem:[#allocation2 + $0x1c] sm:$0xf] %v1069
        %1071 = vrot.lane.b32.xlu0 %v977, 119
        %v1072 = vpop.permute.xlu0 %1071
        %s1073 = scalar_lea.vmem %s7, 8
        %v1074 = vld [vmem:[%s1073] sm:$0x1]
        %v1076 = vlaneseq
        %v1077 = vshrl.u32 %v1076, 7
        %v1078 = vsub.s32 0, %v1077
        %v1079 = vrot.slane %v1074, %v1078
        %v1081 = vmul.f32 %v1072, %v1079
        %1082 = vst [vmem:[#allocation2 + $0x20] sm:$0xf] %v1081
        %v1083 = vld [vmem:[%s5] sm:$0xf]
        %v1084 = vld [vmem:[%s5 + $0x4] sm:$0xf]
        %v1085 = vld [vmem:[%s5 + $0x8] sm:$0xf]
        %v1086 = vld [vmem:[%s5 + $0xc] sm:$0xf]
        %v1087 = vld [vmem:[%s5 + $0x10] sm:$0xf]
        %v1088 = vld [vmem:[%s5 + $0x14] sm:$0xf]
        %v1089 = vld [vmem:[#allocation2] sm:$0xff]
        %v1090 = vld [vmem:[#allocation2 + $0x8] sm:$0xff]
        %v1091 = vld [vmem:[#allocation2 + $0x10] sm:$0xff]
        %v1092 = vld [vmem:[#allocation2 + $0x18] sm:$0xff]
        %v1093 = vld [vmem:[#allocation2 + $0x20] sm:$0xf]
        %v1094 = vpack.c.bf16 %v1090, %v1089
        %v1095 = vpack.c.bf16 %v1092, %v1091
        %v1096 = vpack.c.bf16 %v1093, %v1093
        %v1097 = vld [vmem:[%s6] sm:$0xff]
        %v1098 = vld [vmem:[%s6 + $0x8] sm:$0xff]
        %v1099 = vld [vmem:[%s6 + $0x10] sm:$0xff]
        %v1100 = vld [vmem:[%s6 + $0x18] sm:$0xff]
        %v1101 = vld [vmem:[%s6 + $0x20] sm:$0xff]
        %v1102 = vld [vmem:[%s6 + $0x28] sm:$0xff]
        %1104 = vset.pattern.permute.xlu0 0
        %1105 = vperm.xlu0 %1104, %v1097
        %v1106 = vpop.permute.xlu0 %1105
        %1109 = vset.pattern.permute.xlu0 0
        %1110 = vperm.xlu0 %1109, %v1098
        %v1111 = vpop.permute.xlu0 %1110
        %1114 = vset.pattern.permute.xlu0 0
        %1115 = vperm.xlu0 %1114, %v1099
        %v1116 = vpop.permute.xlu0 %1115
        %1119 = vset.pattern.permute.xlu0 0
        %1120 = vperm.xlu0 %1119, %v1100
        %v1121 = vpop.permute.xlu0 %1120
        %1124 = vset.pattern.permute.xlu0 0
        %1125 = vperm.xlu0 %1124, %v1101
        %v1126 = vpop.permute.xlu0 %1125
        %1129 = vset.pattern.permute.xlu0 0
        %1130 = vperm.xlu0 %1129, %v1102
        %v1131 = vpop.permute.xlu0 %1130
        %v1139 = vunpack.c.l.b16 %v1083
        %v1140 = vunpack.c.l.b16 %v1084
        %v1141 = vunpack.c.l.b16 %v1085
        %v1142 = vunpack.c.l.b16 %v1086
        %v1143 = vunpack.c.l.b16 %v1087
        %v1144 = vunpack.c.l.b16 %v1088
        %v1145 = vpack.c.b16 %v1140, %v1139
        %v1146 = vpack.c.b16 %v1142, %v1141
        %v1147 = vpack.c.b16 %v1144, %v1143
        %vm1148 = vcmask 293888
        %v1150 = vsel %vm1148, %v1145, 0
        %v1153 = vsel %vm1148, %v1146, 0
        %v1156 = vsel %vm1148, %v1147, 0
        %vm1158 = vcmask 1041408
        %v1160 = vsel %vm1158, %v1096, 0
        %1162 = vmatprep.subr.bf16.mxu0 0
        %1163 = vmatpush1.bf16.msra.mxu0 %v1094
        %1164 = vmatprep.subr.bf16.mxu0 0
        %1165 = vmatpush1.bf16.msra.mxu0 %v1095
        %1166 = vmatprep.subr.bf16.mxu0 0
        %1167 = vmatpush1.bf16.msra.mxu0 %v1160
        %1168 = vmatprep.subr.bf16.mxu0 0
        %1169 = vmatpush1.bf16.msra.mxu0 0
        %1170 = vmatprep.subr.bf16.mxu0 0
        %1171 = vmatpush1.bf16.msra.mxu0 0
        %1172 = vmatprep.subr.bf16.mxu0 0
        %1173 = vmatpush1.bf16.msra.mxu0 0
        %1174 = vmatprep.subr.bf16.mxu0 0
        %1175 = vmatpush1.bf16.msra.mxu0 0
        %1176 = vmatprep.subr.bf16.mxu0 0
        %1177 = vmatpush1.bf16.msra.mxu0 0
        %1178 = vmatprep.subr.bf16.mxu0 0
        %1179 = vmatpush1.bf16.msra.mxu0 0
        %1180 = vmatprep.subr.bf16.mxu0 0
        %1181 = vmatpush1.bf16.msra.mxu0 0
        %1182 = vmatprep.subr.bf16.mxu0 0
        %1183 = vmatpush1.bf16.msra.mxu0 0
        %1184 = vmatprep.subr.bf16.mxu0 0
        %1185 = vmatpush1.bf16.msra.mxu0 0
        %1186 = vmatprep.subr.bf16.mxu0 0
        %1187 = vmatpush1.bf16.msra.mxu0 0
        %1188 = vmatprep.subr.bf16.mxu0 0
        %1189 = vmatpush1.bf16.msra.mxu0 0
        %1190 = vmatprep.subr.bf16.mxu0 0
        %1191 = vmatpush1.bf16.msra.mxu0 0
        %1192 = vmatprep.subr.bf16.mxu0 0
        %1193 = vmatpush1.bf16.msra.mxu0 0
        %1194 = vmatprep.mubr.bf16.mxu0 0
        %1195 = vmatmul.mubr.bf16.gmra.mrb[0].mxu0 %v1150
        %v1196 = vpop.f32.mrb[0].mxu0
        %v1197 = vadd.f32 %v1106, %v1196
        %v1198 = vpop.f32.mrb[0].mxu0
        %v1199 = vpop.f32.mrb[0].mxu0
        %v1200 = vadd.f32 %v1111, %v1199
        %v1201 = vpop.f32.mrb[0].mxu0
        %1202 = vmatprep.mubr.bf16.mxu0 0
        %1203 = vmatmul.mubr.bf16.gmra.mrb[0].mxu0 %v1153
        %v1204 = vpop.f32.mrb[0].mxu0
        %v1205 = vadd.f32 %v1116, %v1204
        %v1206 = vpop.f32.mrb[0].mxu0
        %v1207 = vpop.f32.mrb[0].mxu0
        %v1208 = vadd.f32 %v1121, %v1207
        %v1209 = vpop.f32.mrb[0].mxu0
        %1210 = vmatprep.mubr.bf16.mxu0 0
        %1211 = vmatmul.mubr.bf16.gmra.mrb[0].mxu0 %v1156
        %v1212 = vpop.f32.mrb[0].mxu0
        %v1213 = vadd.f32 %v1126, %v1212
        %v1214 = vpop.f32.mrb[0].mxu0
        %v1215 = vpop.f32.mrb[0].mxu0
        %v1216 = vadd.f32 %v1131, %v1215
        %v1217 = vpop.f32.mrb[0].mxu0
        %1218 = vdwg.mxu0
        %v1219 = vadd.f32 %v1197, %v345
        %v1220 = vadd.f32 %v1200, %v346
        %v1221 = vadd.f32 %v1205, %v347
        %v1222 = vadd.f32 %v1208, %v348
        %v1223 = vadd.f32 %v1213, %v349
        %v1224 = vadd.f32 %v1216, %v350
        %1225 = vst [vmem:[%s328] sm:$0xff] %v1219
        %1226 = vst [vmem:[%s328 + $0x8] sm:$0xff] %v1220
        %1227 = vst [vmem:[%s328 + $0x10] sm:$0xff] %v1221
        %1228 = vst [vmem:[%s328 + $0x18] sm:$0xff] %v1222
        %1229 = vst [vmem:[%s328 + $0x20] sm:$0xff] %v1223
        %1230 = vst [vmem:[%s328 + $0x28] sm:$0xff] %v1224
        %s1231 = sand.u32 %s213, 1
        %s1232 = scalar_lea.sflag [#allocation4], %s1231
        %s1233 = sand.u32 %s213, 1
        %s1234 = smul.addr %s1233, 48
        %s1235 = scalar_lea.vmem [#allocation3], %s1234
        // Predicated region
        $region53: #{tpu_custom_call.1} parent=51 // pred_check
          %p1236 = pneg %p223
        $region54: #{tpu_custom_call.1} parent=51 // pred_check_branch
          %1238 = sbr.rel (%p1236) target = $region56
        $region55: #{tpu_custom_call.1} parent=51 // pred_region
          %s1240 = ssub.s32 768, 768
          %1241 = vsyncadd %s1232, %s1240
          %s1242 = smul.addr %s22, 6
          %s1243 = smul.addr %s1242, 128
          %s1244 = scalar_lea.hbm %s8, %s1243
          %s1245 = sshll.u32 %s1235, 4
          %s1246 = int_to_ptr.vmem [resolvable:$true] %s1245
          %1251 = dma.vmem_to_hbm [thread:$0]  %s1246, 768, %s1244, %s1232, 128, 128, 8
        $region56: #{tpu_custom_call.1} parent=51 // pred_fallthru
          _
      $region52: #{tpu_custom_call.1} parent=5 // pred_fallthru
        _
      %p1252 = scmp.le.s32.totalorder 2, %s17
      // Predicated region
      $region57: #{tpu_custom_call.1} parent=5 // pred_check
        %p1253 = pneg %p1252
      $region58: #{tpu_custom_call.1} parent=5 // pred_check_branch
        %1255 = sbr.rel (%p1253) target = $region60
      $region59: #{tpu_custom_call.1} parent=5 // pred_region
        %s1256 = ssub.s32 %s17, 2
        // Predicated region
        $region61: #{tpu_custom_call.1} parent=59 // pred_check
          %p1257 = pneg %p229
        $region62: #{tpu_custom_call.1} parent=59 // pred_check_branch
          %1259 = sbr.rel (%p1257) target = $region64
        $region63: #{tpu_custom_call.1} parent=59 // pred_region
          %s1260 = sand.u32 %s214, 1
          %s1261 = scalar_lea.sflag [#allocation4], %s1260
          %s1262 = sand.u32 %s214, 1
          %s1263 = smul.addr %s1262, 48
          %s1264 = scalar_lea.vmem [#allocation3], %s1263
          %1265 = dma.done %s1261, 768
        $region64: #{tpu_custom_call.1} parent=59 // pred_fallthru
          _
      $region60: #{tpu_custom_call.1} parent=5 // pred_fallthru
        _
    $region6: #{tpu_custom_call.1} parent=1 // loop_footer
      %s21 = sadd.s32 1, %s17
    $region7: #{tpu_custom_call.1} parent=1 // loop_footer_branch
      %16 = sbr.rel target = $region3
    $region8: #{tpu_custom_call.1} parent=1 // loop_exit
      _
    %1266 = vsyncpa [#allocation4], 1
    %s1267 = scalar_lea.sflag [#allocation4], 1
    %1268 = vsyncpa %s1267, 1

</llo_original>
